<compile_context>
chip_gen: v7x
topology: tpu7x:2x2x1
jax: 0.10.0
libtpu: 0.0.40
codegen_flags: <defaults>
</compile_context>

<pallas_src>
import math
from functools import partial

import jax
import jax.numpy as jnp
from jax.experimental import pallas as pl
from jax.experimental.pallas import tpu as pltpu


CFG = dict(vocab=64, max_pos=16, type_vocab=2, hidden=32, heads=4,
           inter=64, layers=2, num_classes=3, seq=8)

LN_EPS = 1e-12            # BertConfig.layer_norm_eps
CLS_PAD = 128             # classifier lane width (unmasked vst)


def _layernorm(x, g, b):
    mean = jnp.mean(x, axis=-1, keepdims=True)
    c = x - mean
    var = jnp.mean(c * c, axis=-1, keepdims=True)
    return c * jax.lax.rsqrt(var + LN_EPS) * g + b


def _gelu_tanh(x):
    # nn.GELU(approximate='tanh') -> exact match.
    return 0.5 * x * (1.0 + jnp.tanh(0.7978845608028654 * (x + 0.044715 * x * x * x)))


def _bf16(x):
    return x.astype(jnp.bfloat16)


def _bert_layer_kernel(emb_ref, mask_ref, embg_ref, embb_ref,
                       wqkv_ref, bqkv_ref, wo_ref, bo_ref, ln1g_ref, ln1b_ref,
                       w1_ref, b1_ref, w2_ref, b2_ref, ln2g_ref, ln2b_ref,
                       clsw_ref, clsb_ref, o_ref, x_scratch,
                       *, batch, seq, num_heads, head_dim, scale):
    H = num_heads * head_dim
    M = batch * seq
    layer = pl.program_id(0)

    # ---- first layer step: embedding LayerNorm into the carried activation ----
    @pl.when(layer == 0)
    def _():
        x_scratch[...] = _layernorm(emb_ref[...], embg_ref[...], embb_ref[...])

    x = x_scratch[...]                 # (B*S, H) f32, carried across layer grid steps
    bias = mask_ref[...]               # (B, 1, S) f32 additive attention-mask bias

    # ---- fused Q|K|V projection: one (B*S,H) x (H,3H) matmul (bf16 MXU, f32 acc) ----
    qkv = jnp.dot(_bf16(x), wqkv_ref[...],
                  preferred_element_type=jnp.float32) + bqkv_ref[...]

    # ---- attention: per head, batched over the batch axis; per-head context is folded
    #      directly into the output projection (no lane concatenate). ----
    wo = wo_ref[...]                   # (H, H) bf16, hoisted out of the head loop
    attn = jnp.zeros((M, H), jnp.float32)
    for h in range(num_heads):         # static unroll (num_heads is small)
        qo = h * head_dim
        ko = H + h * head_dim
        vo = 2 * H + h * head_dim
        qh = qkv[:, qo:qo + head_dim].reshape(batch, seq, head_dim)
        kh = qkv[:, ko:ko + head_dim].reshape(batch, seq, head_dim)
        vh = qkv[:, vo:vo + head_dim].reshape(batch, seq, head_dim)

        s = jnp.einsum('bqd,bkd->bqk', _bf16(qh), _bf16(kh),
                       preferred_element_type=jnp.float32) * scale + bias
        s = s - jnp.max(s, axis=-1, keepdims=True)
        p = jnp.exp(s)
        p = p * pl.reciprocal(jnp.sum(p, axis=-1, keepdims=True), approx=True)
        ctx = jnp.einsum('bqk,bkd->bqd', _bf16(p), _bf16(vh),
                         preferred_element_type=jnp.float32)     # (B, S, dH)

        # partial output projection: (B*S, dH) x (dH, H), sublane-aligned weight rows
        attn = attn + jnp.dot(_bf16(ctx.reshape(M, head_dim)),
                              wo[h * head_dim:(h + 1) * head_dim, :],
                              preferred_element_type=jnp.float32)

    # ---- output projection bias + fused residual + LayerNorm ----
    attn = attn + bo_ref[...]
    x = _layernorm(attn + x, ln1g_ref[...], ln1b_ref[...])

    # ---- FFN (GELU tanh) + fused residual + LayerNorm ----
    h1 = jnp.dot(_bf16(x), w1_ref[...], preferred_element_type=jnp.float32) + b1_ref[...]
    h1 = _gelu_tanh(h1)
    ffn = jnp.dot(_bf16(h1), w2_ref[...], preferred_element_type=jnp.float32) + b2_ref[...]
    x = _layernorm(ffn + x, ln2g_ref[...], ln2b_ref[...])

    x_scratch[...] = x                 # carry to the next layer grid step

    # ---- last layer step: classification head on all rows, one unmasked lane-dense
    #      (B*S, 128) store; the wrapper picks the [CLS] rows / real classes. ----
    @pl.when(layer == pl.num_programs(0) - 1)
    def _():
        o_ref[...] = jnp.dot(_bf16(x), clsw_ref[...],
                             preferred_element_type=jnp.float32) + clsb_ref[...]


def bert_forward(params, input_ids, token_type_ids, attention_mask, cfg):
    B, S = input_ids.shape
    H, L = cfg["hidden"], cfg["layers"]
    nH = cfg["heads"]
    dH = H // nH
    I = cfg["inter"]
    C = cfg["num_classes"]
    M = B * S

    # Embedding gathers (plain-JAX glue); LayerNorm runs inside the fused kernel.
    emb = (params["word_emb"][input_ids]
           + params["type_emb"][token_type_ids]
           + params["pos_emb"][jnp.arange(S)][None, :, :]).astype(jnp.float32)
    emb = emb.reshape(M, H)

    # Additive mask bias: 0 -> very negative (-> 0 after softmax), 1 -> 0.
    mask_bias = jnp.where(attention_mask[:, None, :] == 0, -1e9, 0.0).astype(jnp.float32)

    # bf16 matmul operands (MXU); accumulation / elementwise math stays f32 in-kernel.
    wqkv = params["wqkv"].astype(jnp.bfloat16)
    wo = params["wo"].astype(jnp.bfloat16)
    w1 = params["w1"].astype(jnp.bfloat16)
    w2 = params["w2"].astype(jnp.bfloat16)

    # Classifier lane-padded to 128 so the single output store is unmasked.
    cls_w = jnp.zeros((H, CLS_PAD), jnp.float32).at[:, :C].set(params["cls_w"])
    cls_w = cls_w.astype(jnp.bfloat16)
    cls_b = jnp.zeros((1, CLS_PAD), jnp.float32).at[:, :C].set(params["cls_b"])

    def resident(shape):
        # Whole-array block, constant index across the layer grid (fetched once).
        return pl.BlockSpec(shape, lambda l: (0,) * len(shape))

    def per_layer(*tail):
        # One layer's slice per grid step (leading layer dim squeezed); auto
        # double-buffered by the pipeline -> layer-weight streaming, not residency.
        return pl.BlockSpec((None,) + tail, lambda l: (l,) + (0,) * len(tail))

    kernel = partial(_bert_layer_kernel, batch=B, seq=S, num_heads=nH,
                     head_dim=dH, scale=1.0 / math.sqrt(dH))

    out = pl.pallas_call(
        kernel,
        out_shape=jax.ShapeDtypeStruct((M, CLS_PAD), jnp.float32),
        grid_spec=pltpu.PrefetchScalarGridSpec(
            num_scalar_prefetch=0,
            grid=(L,),                                   # stream encoder layers
            in_specs=[
                resident((M, H)),                        # summed embeddings (B*S, H)
                resident((B, 1, S)),                     # mask bias
                resident((1, H)), resident((1, H)),      # embedding LN
                per_layer(H, 3 * H), per_layer(1, 3 * H),    # fused QKV
                per_layer(H, H), per_layer(1, H),            # attn out proj
                per_layer(1, H), per_layer(1, H),            # LN1
                per_layer(H, I), per_layer(1, I),            # FFN intermediate
                per_layer(I, H), per_layer(1, H),            # FFN out
                per_layer(1, H), per_layer(1, H),            # LN2
                resident((H, CLS_PAD)), resident((1, CLS_PAD)),  # classifier
            ],
            out_specs=pl.BlockSpec((M, CLS_PAD), lambda l: (0, 0)),
            scratch_shapes=[pltpu.VMEM((M, H), jnp.float32)],   # carried activation
        ),
        compiler_params=pltpu.CompilerParams(
            dimension_semantics=("arbitrary",),          # layers are sequential
            vmem_limit_bytes=32 * 1024 * 1024,           # explicit budget (v7x: 64 MiB phys)
        ),
    )(emb, mask_bias,
      params["emb_ln_g"], params["emb_ln_b"],
      wqkv, params["bqkv"], wo, params["bo"],
      params["ln1_g"], params["ln1_b"],
      w1, params["b1"], w2, params["b2"],
      params["ln2_g"], params["ln2_b"],
      cls_w, cls_b)

    # Select the [CLS] row per batch and the real classes (lane-dense store in-kernel,
    # cheap slice here in plain JAX).
    return out.reshape(B, S, CLS_PAD)[:, 0, :C]


def init_params(key, cfg):
    H, I = cfg["hidden"], cfg["inter"]
    L, C = cfg["layers"], cfg["num_classes"]
    keys = iter(jax.random.split(key, 64))

    def w(shape, scale=0.02):
        return (scale * jax.random.normal(next(keys), shape)).astype(jnp.float32)

    word_emb = w((cfg["vocab"], H)).at[0].set(0.0)    # padding_idx=0
    pos_emb = w((cfg["max_pos"], H)).at[0].set(0.0)   # padding_idx=0
    return {
        "word_emb": word_emb,
        "pos_emb": pos_emb,
        "type_emb": w((cfg["type_vocab"], H)),
        "emb_ln_g": jnp.ones((1, H), jnp.float32),
        "emb_ln_b": jnp.zeros((1, H), jnp.float32),
        # Per-layer weights stacked on a leading layer axis; Q|K|V fused along N.
        "wqkv": w((L, H, 3 * H)),
        "bqkv": w((L, 1, 3 * H)),
        "wo": w((L, H, H)),
        "bo": w((L, 1, H)),
        "ln1_g": jnp.ones((L, 1, H), jnp.float32),
        "ln1_b": jnp.zeros((L, 1, H), jnp.float32),
        "w1": w((L, H, I)),
        "b1": w((L, 1, I)),
        "w2": w((L, I, H)),
        "b2": w((L, 1, H)),
        "ln2_g": jnp.ones((L, 1, H), jnp.float32),
        "ln2_b": jnp.zeros((L, 1, H), jnp.float32),
        "cls_w": w((H, C)),
        "cls_b": w((1, C)),
    }


# TODO(synk): at real BERT-base sizes (H=768, I=3072, S=512) the (B*S, *) activation
# slab should additionally be tiled over sequence blocks and the FFN k-tiled; the
# layer-streaming grid used here already keeps only ~2 layers of weights in VMEM.

if __name__ == "__main__":
    key = jax.random.PRNGKey(0)
    pkey, ikey = jax.random.split(key)
    params = init_params(pkey, CFG)

    B, S = 2, CFG["seq"]
    input_ids = jax.random.randint(ikey, (B, S), 0, CFG["vocab"], dtype=jnp.int32)
    token_type_ids = jnp.concatenate(
        [jnp.zeros((B, S // 2), jnp.int32), jnp.ones((B, S // 2), jnp.int32)], axis=1)
    attention_mask = jnp.ones((B, S), jnp.int32).at[1, -2:].set(0)

    fwd = jax.jit(lambda p, i, t, m: bert_forward(p, i, t, m, CFG))
    logits = fwd(params, input_ids, token_type_ids, attention_mask)
    jax.block_until_ready(logits)

    assert logits.shape == (B, CFG["num_classes"])
    assert bool(jnp.all(jnp.isfinite(logits)))
    print("KERNEL_OK")
</pallas_src>

<mosaic_0001>
module attributes {stable_mosaic.version = 11 : i64} {
  func.func @_bert_layer_kernel(%arg0: i32, %arg1: memref<16x32xf32, #tpu.memory_space<vmem>>, %arg2: memref<2x1x8xf32, #tpu.memory_space<vmem>>, %arg3: memref<1x32xf32, #tpu.memory_space<vmem>>, %arg4: memref<1x32xf32, #tpu.memory_space<vmem>>, %arg5: memref<1x32x96xbf16, #tpu.memory_space<vmem>>, %arg6: memref<1x1x96xf32, #tpu.memory_space<vmem>>, %arg7: memref<1x32x32xbf16, #tpu.memory_space<vmem>>, %arg8: memref<1x1x32xf32, #tpu.memory_space<vmem>>, %arg9: memref<1x1x32xf32, #tpu.memory_space<vmem>>, %arg10: memref<1x1x32xf32, #tpu.memory_space<vmem>>, %arg11: memref<1x32x64xbf16, #tpu.memory_space<vmem>>, %arg12: memref<1x1x64xf32, #tpu.memory_space<vmem>>, %arg13: memref<1x64x32xbf16, #tpu.memory_space<vmem>>, %arg14: memref<1x1x32xf32, #tpu.memory_space<vmem>>, %arg15: memref<1x1x32xf32, #tpu.memory_space<vmem>>, %arg16: memref<1x1x32xf32, #tpu.memory_space<vmem>>, %arg17: memref<32x128xbf16, #tpu.memory_space<vmem>>, %arg18: memref<1x128xf32, #tpu.memory_space<vmem>>, %arg19: memref<16x128xf32, #tpu.memory_space<vmem>>, %arg20: memref<16x32xf32, #tpu.memory_space<vmem>>) attributes {dimension_semantics = [#tpu.dimension_semantics<arbitrary>], iteration_bounds = array<i64: 2>, scalar_prefetch = 0 : i64, scratch_operands = 1 : i64, tpu.core_type = #tpu.core_type<tc>, window_params = [{pipeline_mode = #tpu.pipeline_mode<synchronous>, transform_indices = @transform_0, window_bounds = array<i64: 16, 32>}, {pipeline_mode = #tpu.pipeline_mode<synchronous>, transform_indices = @transform_1, window_bounds = array<i64: 2, 1, 8>}, {pipeline_mode = #tpu.pipeline_mode<synchronous>, transform_indices = @transform_2, window_bounds = array<i64: 1, 32>}, {pipeline_mode = #tpu.pipeline_mode<synchronous>, transform_indices = @transform_3, window_bounds = array<i64: 1, 32>}, {transform_indices = @transform_4, window_bounds = array<i64: 1, 32, 96>}, {transform_indices = @transform_5, window_bounds = array<i64: 1, 1, 96>}, {transform_indices = @transform_6, window_bounds = array<i64: 1, 32, 32>}, {transform_indices = @transform_7, window_bounds = array<i64: 1, 1, 32>}, {transform_indices = @transform_8, window_bounds = array<i64: 1, 1, 32>}, {transform_indices = @transform_9, window_bounds = array<i64: 1, 1, 32>}, {transform_indices = @transform_10, window_bounds = array<i64: 1, 32, 64>}, {transform_indices = @transform_11, window_bounds = array<i64: 1, 1, 64>}, {transform_indices = @transform_12, window_bounds = array<i64: 1, 64, 32>}, {transform_indices = @transform_13, window_bounds = array<i64: 1, 1, 32>}, {transform_indices = @transform_14, window_bounds = array<i64: 1, 1, 32>}, {transform_indices = @transform_15, window_bounds = array<i64: 1, 1, 32>}, {pipeline_mode = #tpu.pipeline_mode<synchronous>, transform_indices = @transform_16, window_bounds = array<i64: 32, 128>}, {pipeline_mode = #tpu.pipeline_mode<synchronous>, transform_indices = @transform_17, window_bounds = array<i64: 1, 128>}, {pipeline_mode = #tpu.pipeline_mode<synchronous>, transform_indices = @transform_18, window_bounds = array<i64: 16, 128>}]} {
    %c0_i32 = arith.constant 0 : i32
    %0 = arith.cmpi eq, %arg0, %c0_i32 : i32
    %1 = arith.extui %0 : i1 to i32
    %c0_i32_0 = arith.constant 0 : i32
    %2 = arith.cmpi ne, %1, %c0_i32_0 : i32
    scf.if %2 {
      %c0_85 = arith.constant 0 : index
      %c0_86 = arith.constant 0 : index
      %227 = vector.load %arg1[%c0_85, %c0_86] : memref<16x32xf32, #tpu.memory_space<vmem>>, vector<16x32xf32>
      %c0_87 = arith.constant 0 : index
      %c0_88 = arith.constant 0 : index
      %228 = vector.load %arg3[%c0_87, %c0_88] : memref<1x32xf32, #tpu.memory_space<vmem>>, vector<1x32xf32>
      %c0_89 = arith.constant 0 : index
      %c0_90 = arith.constant 0 : index
      %229 = vector.load %arg4[%c0_89, %c0_90] : memref<1x32xf32, #tpu.memory_space<vmem>>, vector<1x32xf32>
      %cst_91 = arith.constant dense<0.000000e+00> : vector<16xf32>
      %230 = vector.multi_reduction <add>, %227, %cst_91 [1] : vector<16x32xf32> to vector<16xf32>
      %231 = vector.shape_cast %230 : vector<16xf32> to vector<16x1xf32>
      %cst_92 = arith.constant 3.200000e+01 : f32
      %232 = vector.broadcast %cst_92 : f32 to vector<16x1xf32>
      %233 = arith.divf %231, %232 : vector<16x1xf32>
      %234 = vector.broadcast %233 : vector<16x1xf32> to vector<16x32xf32>
      %235 = arith.subf %227, %234 : vector<16x32xf32>
      %236 = arith.mulf %235, %235 : vector<16x32xf32>
      %cst_93 = arith.constant dense<0.000000e+00> : vector<16xf32>
      %237 = vector.multi_reduction <add>, %236, %cst_93 [1] : vector<16x32xf32> to vector<16xf32>
      %238 = vector.shape_cast %237 : vector<16xf32> to vector<16x1xf32>
      %cst_94 = arith.constant 3.200000e+01 : f32
      %239 = vector.broadcast %cst_94 : f32 to vector<16x1xf32>
      %240 = arith.divf %238, %239 : vector<16x1xf32>
      %cst_95 = arith.constant 9.99999996E-13 : f32
      %241 = vector.broadcast %cst_95 : f32 to vector<16x1xf32>
      %242 = arith.addf %240, %241 : vector<16x1xf32>
      %243 = math.rsqrt %242 : vector<16x1xf32>
      %244 = vector.broadcast %243 : vector<16x1xf32> to vector<16x32xf32>
      %245 = arith.mulf %235, %244 : vector<16x32xf32>
      %246 = vector.broadcast %228 : vector<1x32xf32> to vector<16x32xf32>
      %247 = arith.mulf %245, %246 : vector<16x32xf32>
      %248 = vector.broadcast %229 : vector<1x32xf32> to vector<16x32xf32>
      %249 = arith.addf %247, %248 : vector<16x32xf32>
      %c0_96 = arith.constant 0 : index
      %c0_97 = arith.constant 0 : index
      %250 = vector.load %arg20[%c0_96, %c0_97] : memref<16x32xf32, #tpu.memory_space<vmem>>, vector<16x32xf32>
      tpu.vector_store %arg20[%c0_96, %c0_97], %249 {strides = array<i32>} : memref<16x32xf32, #tpu.memory_space<vmem>>, vector<16x32xf32>,
    } else {
    }
    %c0 = arith.constant 0 : index
    %c0_1 = arith.constant 0 : index
    %3 = vector.load %arg20[%c0, %c0_1] : memref<16x32xf32, #tpu.memory_space<vmem>>, vector<16x32xf32>
    %c0_2 = arith.constant 0 : index
    %c0_3 = arith.constant 0 : index
    %c0_4 = arith.constant 0 : index
    %4 = vector.load %arg2[%c0_2, %c0_3, %c0_4] : memref<2x1x8xf32, #tpu.memory_space<vmem>>, vector<2x1x8xf32>
    %5 = arith.truncf %3 : vector<16x32xf32> to vector<16x32xbf16>
    %c0_5 = arith.constant 0 : index
    %c0_6 = arith.constant 0 : index
    %c0_7 = arith.constant 0 : index
    %6 = vector.load %arg5[%c0_5, %c0_6, %c0_7] : memref<1x32x96xbf16, #tpu.memory_space<vmem>>, vector<1x32x96xbf16>
    %7 = vector.shape_cast %6 : vector<1x32x96xbf16> to vector<32x96xbf16>
    %cst = arith.constant dense<0.000000e+00> : vector<16x96xf32>
    %8 = tpu.matmul %5, %7, %cst {dimension_numbers = #tpu.dot_dimension_numbers<[1], [0], [0], [1], [0, 0, 1, 1], [], []>} : vector<16x32xbf16>, vector<32x96xbf16>, vector<16x96xf32> -> vector<16x96xf32>
    %c0_8 = arith.constant 0 : index
    %c0_9 = arith.constant 0 : index
    %c0_10 = arith.constant 0 : index
    %9 = vector.load %arg6[%c0_8, %c0_9, %c0_10] : memref<1x1x96xf32, #tpu.memory_space<vmem>>, vector<1x1x96xf32>
    %10 = vector.shape_cast %9 : vector<1x1x96xf32> to vector<1x96xf32>
    %11 = vector.broadcast %10 : vector<1x96xf32> to vector<16x96xf32>
    %12 = arith.addf %8, %11 : vector<16x96xf32>
    %c0_11 = arith.constant 0 : index
    %c0_12 = arith.constant 0 : index
    %c0_13 = arith.constant 0 : index
    %13 = vector.load %arg7[%c0_11, %c0_12, %c0_13] : memref<1x32x32xbf16, #tpu.memory_space<vmem>>, vector<1x32x32xbf16>
    %14 = vector.shape_cast %13 : vector<1x32x32xbf16> to vector<32x32xbf16>
    %cst_14 = arith.constant 0.000000e+00 : f32
    %15 = vector.broadcast %cst_14 : f32 to vector<16x32xf32>
    %16 = vector.extract_strided_slice %12 {offsets = [0, 0], sizes = [16, 8], strides = [1, 1]} : vector<16x96xf32> to vector<16x8xf32>
    %17 = vector.shape_cast %16 : vector<16x8xf32> to vector<2x8x8xf32>
    %18 = vector.extract_strided_slice %12 {offsets = [0, 32], sizes = [16, 8], strides = [1, 1]} : vector<16x96xf32> to vector<16x8xf32>
    %19 = vector.shape_cast %18 : vector<16x8xf32> to vector<2x8x8xf32>
    %20 = vector.extract_strided_slice %12 {offsets = [0, 64], sizes = [16, 8], strides = [1, 1]} : vector<16x96xf32> to vector<16x8xf32>
    %21 = vector.shape_cast %20 : vector<16x8xf32> to vector<2x8x8xf32>
    %22 = arith.truncf %17 : vector<2x8x8xf32> to vector<2x8x8xbf16>
    %23 = arith.truncf %19 : vector<2x8x8xf32> to vector<2x8x8xbf16>
    "tpu.trace_start"() <{level = 10 : i32, message = "bqd,bkd->bqk"}> : () -> ()
    %cst_15 = arith.constant dense<0.000000e+00> : vector<2x8x8xf32>
    %24 = tpu.matmul %22, %23, %cst_15 {dimension_numbers = #tpu.dot_dimension_numbers<[2], [2], [1], [1], [0, 0, 0, 1, 1, 1], [0], [0]>} : vector<2x8x8xbf16>, vector<2x8x8xbf16>, vector<2x8x8xf32> -> vector<2x8x8xf32>
    "tpu.trace_stop"() : () -> ()
    %cst_16 = arith.constant 0.353553385 : f32
    %25 = vector.broadcast %cst_16 : f32 to vector<2x8x8xf32>
    %26 = arith.mulf %24, %25 : vector<2x8x8xf32>
    %27 = vector.broadcast %4 : vector<2x1x8xf32> to vector<2x8x8xf32>
    %28 = arith.addf %26, %27 : vector<2x8x8xf32>
    %cst_17 = arith.constant dense<0xFF800000> : vector<2x8xf32>
    %29 = vector.multi_reduction <maximumf>, %28, %cst_17 [2] : vector<2x8x8xf32> to vector<2x8xf32>
    %30 = vector.shape_cast %29 : vector<2x8xf32> to vector<2x8x1xf32>
    %31 = vector.broadcast %30 : vector<2x8x1xf32> to vector<2x8x8xf32>
    %32 = arith.subf %28, %31 : vector<2x8x8xf32>
    %33 = math.exp %32 : vector<2x8x8xf32>
    %cst_18 = arith.constant dense<0.000000e+00> : vector<2x8xf32>
    %34 = vector.multi_reduction <add>, %33, %cst_18 [2] : vector<2x8x8xf32> to vector<2x8xf32>
    %35 = vector.shape_cast %34 : vector<2x8xf32> to vector<2x8x1xf32>
    %36 = tpu.reciprocal %35 {approx = true} : vector<2x8x1xf32> -> vector<2x8x1xf32>
    %37 = vector.broadcast %36 : vector<2x8x1xf32> to vector<2x8x8xf32>
    %38 = arith.mulf %33, %37 : vector<2x8x8xf32>
    %39 = arith.truncf %38 : vector<2x8x8xf32> to vector<2x8x8xbf16>
    %40 = arith.truncf %21 : vector<2x8x8xf32> to vector<2x8x8xbf16>
    "tpu.trace_start"() <{level = 10 : i32, message = "bqk,bkd->bqd"}> : () -> ()
    %cst_19 = arith.constant dense<0.000000e+00> : vector<2x8x8xf32>
    %41 = tpu.matmul %39, %40, %cst_19 {dimension_numbers = #tpu.dot_dimension_numbers<[2], [1], [1], [2], [0, 0, 0, 1, 1, 2], [0], [0]>} : vector<2x8x8xbf16>, vector<2x8x8xbf16>, vector<2x8x8xf32> -> vector<2x8x8xf32>
    "tpu.trace_stop"() : () -> ()
    %42 = vector.shape_cast %41 : vector<2x8x8xf32> to vector<16x8xf32>
    %43 = arith.truncf %42 : vector<16x8xf32> to vector<16x8xbf16>
    %44 = vector.extract_strided_slice %14 {offsets = [0, 0], sizes = [8, 32], strides = [1, 1]} : vector<32x32xbf16> to vector<8x32xbf16>
    %cst_20 = arith.constant dense<0.000000e+00> : vector<16x32xf32>
    %45 = tpu.matmul %43, %44, %cst_20 {dimension_numbers = #tpu.dot_dimension_numbers<[1], [0], [0], [1], [0, 0, 1, 1], [], []>} : vector<16x8xbf16>, vector<8x32xbf16>, vector<16x32xf32> -> vector<16x32xf32>
    %46 = arith.addf %15, %45 : vector<16x32xf32>
    %47 = vector.extract_strided_slice %12 {offsets = [0, 8], sizes = [16, 8], strides = [1, 1]} : vector<16x96xf32> to vector<16x8xf32>
    %48 = vector.shape_cast %47 : vector<16x8xf32> to vector<2x8x8xf32>
    %49 = vector.extract_strided_slice %12 {offsets = [0, 40], sizes = [16, 8], strides = [1, 1]} : vector<16x96xf32> to vector<16x8xf32>
    %50 = vector.shape_cast %49 : vector<16x8xf32> to vector<2x8x8xf32>
    %51 = vector.extract_strided_slice %12 {offsets = [0, 72], sizes = [16, 8], strides = [1, 1]} : vector<16x96xf32> to vector<16x8xf32>
    %52 = vector.shape_cast %51 : vector<16x8xf32> to vector<2x8x8xf32>
    %53 = arith.truncf %48 : vector<2x8x8xf32> to vector<2x8x8xbf16>
    %54 = arith.truncf %50 : vector<2x8x8xf32> to vector<2x8x8xbf16>
    "tpu.trace_start"() <{level = 10 : i32, message = "bqd,bkd->bqk"}> : () -> ()
    %cst_21 = arith.constant dense<0.000000e+00> : vector<2x8x8xf32>
    %55 = tpu.matmul %53, %54, %cst_21 {dimension_numbers = #tpu.dot_dimension_numbers<[2], [2], [1], [1], [0, 0, 0, 1, 1, 1], [0], [0]>} : vector<2x8x8xbf16>, vector<2x8x8xbf16>, vector<2x8x8xf32> -> vector<2x8x8xf32>
    "tpu.trace_stop"() : () -> ()
    %cst_22 = arith.constant 0.353553385 : f32
    %56 = vector.broadcast %cst_22 : f32 to vector<2x8x8xf32>
    %57 = arith.mulf %55, %56 : vector<2x8x8xf32>
    %58 = vector.broadcast %4 : vector<2x1x8xf32> to vector<2x8x8xf32>
    %59 = arith.addf %57, %58 : vector<2x8x8xf32>
    %cst_23 = arith.constant dense<0xFF800000> : vector<2x8xf32>
    %60 = vector.multi_reduction <maximumf>, %59, %cst_23 [2] : vector<2x8x8xf32> to vector<2x8xf32>
    %61 = vector.shape_cast %60 : vector<2x8xf32> to vector<2x8x1xf32>
    %62 = vector.broadcast %61 : vector<2x8x1xf32> to vector<2x8x8xf32>
    %63 = arith.subf %59, %62 : vector<2x8x8xf32>
    %64 = math.exp %63 : vector<2x8x8xf32>
    %cst_24 = arith.constant dense<0.000000e+00> : vector<2x8xf32>
    %65 = vector.multi_reduction <add>, %64, %cst_24 [2] : vector<2x8x8xf32> to vector<2x8xf32>
    %66 = vector.shape_cast %65 : vector<2x8xf32> to vector<2x8x1xf32>
    %67 = tpu.reciprocal %66 {approx = true} : vector<2x8x1xf32> -> vector<2x8x1xf32>
    %68 = vector.broadcast %67 : vector<2x8x1xf32> to vector<2x8x8xf32>
    %69 = arith.mulf %64, %68 : vector<2x8x8xf32>
    %70 = arith.truncf %69 : vector<2x8x8xf32> to vector<2x8x8xbf16>
    %71 = arith.truncf %52 : vector<2x8x8xf32> to vector<2x8x8xbf16>
    "tpu.trace_start"() <{level = 10 : i32, message = "bqk,bkd->bqd"}> : () -> ()
    %cst_25 = arith.constant dense<0.000000e+00> : vector<2x8x8xf32>
    %72 = tpu.matmul %70, %71, %cst_25 {dimension_numbers = #tpu.dot_dimension_numbers<[2], [1], [1], [2], [0, 0, 0, 1, 1, 2], [0], [0]>} : vector<2x8x8xbf16>, vector<2x8x8xbf16>, vector<2x8x8xf32> -> vector<2x8x8xf32>
    "tpu.trace_stop"() : () -> ()
    %73 = vector.shape_cast %72 : vector<2x8x8xf32> to vector<16x8xf32>
    %74 = arith.truncf %73 : vector<16x8xf32> to vector<16x8xbf16>
    %75 = vector.extract_strided_slice %14 {offsets = [8, 0], sizes = [8, 32], strides = [1, 1]} : vector<32x32xbf16> to vector<8x32xbf16>
    %cst_26 = arith.constant dense<0.000000e+00> : vector<16x32xf32>
    %76 = tpu.matmul %74, %75, %cst_26 {dimension_numbers = #tpu.dot_dimension_numbers<[1], [0], [0], [1], [0, 0, 1, 1], [], []>} : vector<16x8xbf16>, vector<8x32xbf16>, vector<16x32xf32> -> vector<16x32xf32>
    %77 = arith.addf %46, %76 : vector<16x32xf32>
    %78 = vector.extract_strided_slice %12 {offsets = [0, 16], sizes = [16, 8], strides = [1, 1]} : vector<16x96xf32> to vector<16x8xf32>
    %79 = vector.shape_cast %78 : vector<16x8xf32> to vector<2x8x8xf32>
    %80 = vector.extract_strided_slice %12 {offsets = [0, 48], sizes = [16, 8], strides = [1, 1]} : vector<16x96xf32> to vector<16x8xf32>
    %81 = vector.shape_cast %80 : vector<16x8xf32> to vector<2x8x8xf32>
    %82 = vector.extract_strided_slice %12 {offsets = [0, 80], sizes = [16, 8], strides = [1, 1]} : vector<16x96xf32> to vector<16x8xf32>
    %83 = vector.shape_cast %82 : vector<16x8xf32> to vector<2x8x8xf32>
    %84 = arith.truncf %79 : vector<2x8x8xf32> to vector<2x8x8xbf16>
    %85 = arith.truncf %81 : vector<2x8x8xf32> to vector<2x8x8xbf16>
    "tpu.trace_start"() <{level = 10 : i32, message = "bqd,bkd->bqk"}> : () -> ()
    %cst_27 = arith.constant dense<0.000000e+00> : vector<2x8x8xf32>
    %86 = tpu.matmul %84, %85, %cst_27 {dimension_numbers = #tpu.dot_dimension_numbers<[2], [2], [1], [1], [0, 0, 0, 1, 1, 1], [0], [0]>} : vector<2x8x8xbf16>, vector<2x8x8xbf16>, vector<2x8x8xf32> -> vector<2x8x8xf32>
    "tpu.trace_stop"() : () -> ()
    %cst_28 = arith.constant 0.353553385 : f32
    %87 = vector.broadcast %cst_28 : f32 to vector<2x8x8xf32>
    %88 = arith.mulf %86, %87 : vector<2x8x8xf32>
    %89 = vector.broadcast %4 : vector<2x1x8xf32> to vector<2x8x8xf32>
    %90 = arith.addf %88, %89 : vector<2x8x8xf32>
    %cst_29 = arith.constant dense<0xFF800000> : vector<2x8xf32>
    %91 = vector.multi_reduction <maximumf>, %90, %cst_29 [2] : vector<2x8x8xf32> to vector<2x8xf32>
    %92 = vector.shape_cast %91 : vector<2x8xf32> to vector<2x8x1xf32>
    %93 = vector.broadcast %92 : vector<2x8x1xf32> to vector<2x8x8xf32>
    %94 = arith.subf %90, %93 : vector<2x8x8xf32>
    %95 = math.exp %94 : vector<2x8x8xf32>
    %cst_30 = arith.constant dense<0.000000e+00> : vector<2x8xf32>
    %96 = vector.multi_reduction <add>, %95, %cst_30 [2] : vector<2x8x8xf32> to vector<2x8xf32>
    %97 = vector.shape_cast %96 : vector<2x8xf32> to vector<2x8x1xf32>
    %98 = tpu.reciprocal %97 {approx = true} : vector<2x8x1xf32> -> vector<2x8x1xf32>
    %99 = vector.broadcast %98 : vector<2x8x1xf32> to vector<2x8x8xf32>
    %100 = arith.mulf %95, %99 : vector<2x8x8xf32>
    %101 = arith.truncf %100 : vector<2x8x8xf32> to vector<2x8x8xbf16>
    %102 = arith.truncf %83 : vector<2x8x8xf32> to vector<2x8x8xbf16>
    "tpu.trace_start"() <{level = 10 : i32, message = "bqk,bkd->bqd"}> : () -> ()
    %cst_31 = arith.constant dense<0.000000e+00> : vector<2x8x8xf32>
    %103 = tpu.matmul %101, %102, %cst_31 {dimension_numbers = #tpu.dot_dimension_numbers<[2], [1], [1], [2], [0, 0, 0, 1, 1, 2], [0], [0]>} : vector<2x8x8xbf16>, vector<2x8x8xbf16>, vector<2x8x8xf32> -> vector<2x8x8xf32>
    "tpu.trace_stop"() : () -> ()
    %104 = vector.shape_cast %103 : vector<2x8x8xf32> to vector<16x8xf32>
    %105 = arith.truncf %104 : vector<16x8xf32> to vector<16x8xbf16>
    %106 = vector.extract_strided_slice %14 {offsets = [16, 0], sizes = [8, 32], strides = [1, 1]} : vector<32x32xbf16> to vector<8x32xbf16>
    %cst_32 = arith.constant dense<0.000000e+00> : vector<16x32xf32>
    %107 = tpu.matmul %105, %106, %cst_32 {dimension_numbers = #tpu.dot_dimension_numbers<[1], [0], [0], [1], [0, 0, 1, 1], [], []>} : vector<16x8xbf16>, vector<8x32xbf16>, vector<16x32xf32> -> vector<16x32xf32>
    %108 = arith.addf %77, %107 : vector<16x32xf32>
    %109 = vector.extract_strided_slice %12 {offsets = [0, 24], sizes = [16, 8], strides = [1, 1]} : vector<16x96xf32> to vector<16x8xf32>
    %110 = vector.shape_cast %109 : vector<16x8xf32> to vector<2x8x8xf32>
    %111 = vector.extract_strided_slice %12 {offsets = [0, 56], sizes = [16, 8], strides = [1, 1]} : vector<16x96xf32> to vector<16x8xf32>
    %112 = vector.shape_cast %111 : vector<16x8xf32> to vector<2x8x8xf32>
    %113 = vector.extract_strided_slice %12 {offsets = [0, 88], sizes = [16, 8], strides = [1, 1]} : vector<16x96xf32> to vector<16x8xf32>
    %114 = vector.shape_cast %113 : vector<16x8xf32> to vector<2x8x8xf32>
    %115 = arith.truncf %110 : vector<2x8x8xf32> to vector<2x8x8xbf16>
    %116 = arith.truncf %112 : vector<2x8x8xf32> to vector<2x8x8xbf16>
    "tpu.trace_start"() <{level = 10 : i32, message = "bqd,bkd->bqk"}> : () -> ()
    %cst_33 = arith.constant dense<0.000000e+00> : vector<2x8x8xf32>
    %117 = tpu.matmul %115, %116, %cst_33 {dimension_numbers = #tpu.dot_dimension_numbers<[2], [2], [1], [1], [0, 0, 0, 1, 1, 1], [0], [0]>} : vector<2x8x8xbf16>, vector<2x8x8xbf16>, vector<2x8x8xf32> -> vector<2x8x8xf32>
    "tpu.trace_stop"() : () -> ()
    %cst_34 = arith.constant 0.353553385 : f32
    %118 = vector.broadcast %cst_34 : f32 to vector<2x8x8xf32>
    %119 = arith.mulf %117, %118 : vector<2x8x8xf32>
    %120 = vector.broadcast %4 : vector<2x1x8xf32> to vector<2x8x8xf32>
    %121 = arith.addf %119, %120 : vector<2x8x8xf32>
    %cst_35 = arith.constant dense<0xFF800000> : vector<2x8xf32>
    %122 = vector.multi_reduction <maximumf>, %121, %cst_35 [2] : vector<2x8x8xf32> to vector<2x8xf32>
    %123 = vector.shape_cast %122 : vector<2x8xf32> to vector<2x8x1xf32>
    %124 = vector.broadcast %123 : vector<2x8x1xf32> to vector<2x8x8xf32>
    %125 = arith.subf %121, %124 : vector<2x8x8xf32>
    %126 = math.exp %125 : vector<2x8x8xf32>
    %cst_36 = arith.constant dense<0.000000e+00> : vector<2x8xf32>
    %127 = vector.multi_reduction <add>, %126, %cst_36 [2] : vector<2x8x8xf32> to vector<2x8xf32>
    %128 = vector.shape_cast %127 : vector<2x8xf32> to vector<2x8x1xf32>
    %129 = tpu.reciprocal %128 {approx = true} : vector<2x8x1xf32> -> vector<2x8x1xf32>
    %130 = vector.broadcast %129 : vector<2x8x1xf32> to vector<2x8x8xf32>
    %131 = arith.mulf %126, %130 : vector<2x8x8xf32>
    %132 = arith.truncf %131 : vector<2x8x8xf32> to vector<2x8x8xbf16>
    %133 = arith.truncf %114 : vector<2x8x8xf32> to vector<2x8x8xbf16>
    "tpu.trace_start"() <{level = 10 : i32, message = "bqk,bkd->bqd"}> : () -> ()
    %cst_37 = arith.constant dense<0.000000e+00> : vector<2x8x8xf32>
    %134 = tpu.matmul %132, %133, %cst_37 {dimension_numbers = #tpu.dot_dimension_numbers<[2], [1], [1], [2], [0, 0, 0, 1, 1, 2], [0], [0]>} : vector<2x8x8xbf16>, vector<2x8x8xbf16>, vector<2x8x8xf32> -> vector<2x8x8xf32>
    "tpu.trace_stop"() : () -> ()
    %135 = vector.shape_cast %134 : vector<2x8x8xf32> to vector<16x8xf32>
    %136 = arith.truncf %135 : vector<16x8xf32> to vector<16x8xbf16>
    %137 = vector.extract_strided_slice %14 {offsets = [24, 0], sizes = [8, 32], strides = [1, 1]} : vector<32x32xbf16> to vector<8x32xbf16>
    %cst_38 = arith.constant dense<0.000000e+00> : vector<16x32xf32>
    %138 = tpu.matmul %136, %137, %cst_38 {dimension_numbers = #tpu.dot_dimension_numbers<[1], [0], [0], [1], [0, 0, 1, 1], [], []>} : vector<16x8xbf16>, vector<8x32xbf16>, vector<16x32xf32> -> vector<16x32xf32>
    %139 = arith.addf %108, %138 : vector<16x32xf32>
    %c0_39 = arith.constant 0 : index
    %c0_40 = arith.constant 0 : index
    %c0_41 = arith.constant 0 : index
    %140 = vector.load %arg8[%c0_39, %c0_40, %c0_41] : memref<1x1x32xf32, #tpu.memory_space<vmem>>, vector<1x1x32xf32>
    %141 = vector.shape_cast %140 : vector<1x1x32xf32> to vector<1x32xf32>
    %142 = vector.broadcast %141 : vector<1x32xf32> to vector<16x32xf32>
    %143 = arith.addf %139, %142 : vector<16x32xf32>
    %144 = arith.addf %143, %3 : vector<16x32xf32>
    %c0_42 = arith.constant 0 : index
    %c0_43 = arith.constant 0 : index
    %c0_44 = arith.constant 0 : index
    %145 = vector.load %arg9[%c0_42, %c0_43, %c0_44] : memref<1x1x32xf32, #tpu.memory_space<vmem>>, vector<1x1x32xf32>
    %146 = vector.shape_cast %145 : vector<1x1x32xf32> to vector<1x32xf32>
    %c0_45 = arith.constant 0 : index
    %c0_46 = arith.constant 0 : index
    %c0_47 = arith.constant 0 : index
    %147 = vector.load %arg10[%c0_45, %c0_46, %c0_47] : memref<1x1x32xf32, #tpu.memory_space<vmem>>, vector<1x1x32xf32>
    %148 = vector.shape_cast %147 : vector<1x1x32xf32> to vector<1x32xf32>
    %cst_48 = arith.constant dense<0.000000e+00> : vector<16xf32>
    %149 = vector.multi_reduction <add>, %144, %cst_48 [1] : vector<16x32xf32> to vector<16xf32>
    %150 = vector.shape_cast %149 : vector<16xf32> to vector<16x1xf32>
    %cst_49 = arith.constant 3.200000e+01 : f32
    %151 = vector.broadcast %cst_49 : f32 to vector<16x1xf32>
    %152 = arith.divf %150, %151 : vector<16x1xf32>
    %153 = vector.broadcast %152 : vector<16x1xf32> to vector<16x32xf32>
    %154 = arith.subf %144, %153 : vector<16x32xf32>
    %155 = arith.mulf %154, %154 : vector<16x32xf32>
    %cst_50 = arith.constant dense<0.000000e+00> : vector<16xf32>
    %156 = vector.multi_reduction <add>, %155, %cst_50 [1] : vector<16x32xf32> to vector<16xf32>
    %157 = vector.shape_cast %156 : vector<16xf32> to vector<16x1xf32>
    %cst_51 = arith.constant 3.200000e+01 : f32
    %158 = vector.broadcast %cst_51 : f32 to vector<16x1xf32>
    %159 = arith.divf %157, %158 : vector<16x1xf32>
    %cst_52 = arith.constant 9.99999996E-13 : f32
    %160 = vector.broadcast %cst_52 : f32 to vector<16x1xf32>
    %161 = arith.addf %159, %160 : vector<16x1xf32>
    %162 = math.rsqrt %161 : vector<16x1xf32>
    %163 = vector.broadcast %162 : vector<16x1xf32> to vector<16x32xf32>
    %164 = arith.mulf %154, %163 : vector<16x32xf32>
    %165 = vector.broadcast %146 : vector<1x32xf32> to vector<16x32xf32>
    %166 = arith.mulf %164, %165 : vector<16x32xf32>
    %167 = vector.broadcast %148 : vector<1x32xf32> to vector<16x32xf32>
    %168 = arith.addf %166, %167 : vector<16x32xf32>
    %169 = arith.truncf %168 : vector<16x32xf32> to vector<16x32xbf16>
    %c0_53 = arith.constant 0 : index
    %c0_54 = arith.constant 0 : index
    %c0_55 = arith.constant 0 : index
    %170 = vector.load %arg11[%c0_53, %c0_54, %c0_55] : memref<1x32x64xbf16, #tpu.memory_space<vmem>>, vector<1x32x64xbf16>
    %171 = vector.shape_cast %170 : vector<1x32x64xbf16> to vector<32x64xbf16>
    %cst_56 = arith.constant dense<0.000000e+00> : vector<16x64xf32>
    %172 = tpu.matmul %169, %171, %cst_56 {dimension_numbers = #tpu.dot_dimension_numbers<[1], [0], [0], [1], [0, 0, 1, 1], [], []>} : vector<16x32xbf16>, vector<32x64xbf16>, vector<16x64xf32> -> vector<16x64xf32>
    %c0_57 = arith.constant 0 : index
    %c0_58 = arith.constant 0 : index
    %c0_59 = arith.constant 0 : index
    %173 = vector.load %arg12[%c0_57, %c0_58, %c0_59] : memref<1x1x64xf32, #tpu.memory_space<vmem>>, vector<1x1x64xf32>
    %174 = vector.shape_cast %173 : vector<1x1x64xf32> to vector<1x64xf32>
    %175 = vector.broadcast %174 : vector<1x64xf32> to vector<16x64xf32>
    %176 = arith.addf %172, %175 : vector<16x64xf32>
    %cst_60 = arith.constant 5.000000e-01 : f32
    %177 = vector.broadcast %cst_60 : f32 to vector<16x64xf32>
    %178 = arith.mulf %177, %176 : vector<16x64xf32>
    %cst_61 = arith.constant 4.471500e-02 : f32
    %179 = vector.broadcast %cst_61 : f32 to vector<16x64xf32>
    %180 = arith.mulf %179, %176 : vector<16x64xf32>
    %181 = arith.mulf %180, %176 : vector<16x64xf32>
    %182 = arith.mulf %181, %176 : vector<16x64xf32>
    %183 = arith.addf %176, %182 : vector<16x64xf32>
    %cst_62 = arith.constant 0.797884583 : f32
    %184 = vector.broadcast %cst_62 : f32 to vector<16x64xf32>
    %185 = arith.mulf %184, %183 : vector<16x64xf32>
    %186 = math.tanh %185 : vector<16x64xf32>
    %cst_63 = arith.constant 1.000000e+00 : f32
    %187 = vector.broadcast %cst_63 : f32 to vector<16x64xf32>
    %188 = arith.addf %187, %186 : vector<16x64xf32>
    %189 = arith.mulf %178, %188 : vector<16x64xf32>
    %190 = arith.truncf %189 : vector<16x64xf32> to vector<16x64xbf16>
    %c0_64 = arith.constant 0 : index
    %c0_65 = arith.constant 0 : index
    %c0_66 = arith.constant 0 : index
    %191 = vector.load %arg13[%c0_64, %c0_65, %c0_66] : memref<1x64x32xbf16, #tpu.memory_space<vmem>>, vector<1x64x32xbf16>
    %192 = vector.shape_cast %191 : vector<1x64x32xbf16> to vector<64x32xbf16>
    %cst_67 = arith.constant dense<0.000000e+00> : vector<16x32xf32>
    %193 = tpu.matmul %190, %192, %cst_67 {dimension_numbers = #tpu.dot_dimension_numbers<[1], [0], [0], [1], [0, 0, 1, 1], [], []>} : vector<16x64xbf16>, vector<64x32xbf16>, vector<16x32xf32> -> vector<16x32xf32>
    %c0_68 = arith.constant 0 : index
    %c0_69 = arith.constant 0 : index
    %c0_70 = arith.constant 0 : index
    %194 = vector.load %arg14[%c0_68, %c0_69, %c0_70] : memref<1x1x32xf32, #tpu.memory_space<vmem>>, vector<1x1x32xf32>
    %195 = vector.shape_cast %194 : vector<1x1x32xf32> to vector<1x32xf32>
    %196 = vector.broadcast %195 : vector<1x32xf32> to vector<16x32xf32>
    %197 = arith.addf %193, %196 : vector<16x32xf32>
    %198 = arith.addf %197, %168 : vector<16x32xf32>
    %c0_71 = arith.constant 0 : index
    %c0_72 = arith.constant 0 : index
    %c0_73 = arith.constant 0 : index
    %199 = vector.load %arg15[%c0_71, %c0_72, %c0_73] : memref<1x1x32xf32, #tpu.memory_space<vmem>>, vector<1x1x32xf32>
    %200 = vector.shape_cast %199 : vector<1x1x32xf32> to vector<1x32xf32>
    %c0_74 = arith.constant 0 : index
    %c0_75 = arith.constant 0 : index
    %c0_76 = arith.constant 0 : index
    %201 = vector.load %arg16[%c0_74, %c0_75, %c0_76] : memref<1x1x32xf32, #tpu.memory_space<vmem>>, vector<1x1x32xf32>
    %202 = vector.shape_cast %201 : vector<1x1x32xf32> to vector<1x32xf32>
    %cst_77 = arith.constant dense<0.000000e+00> : vector<16xf32>
    %203 = vector.multi_reduction <add>, %198, %cst_77 [1] : vector<16x32xf32> to vector<16xf32>
    %204 = vector.shape_cast %203 : vector<16xf32> to vector<16x1xf32>
    %cst_78 = arith.constant 3.200000e+01 : f32
    %205 = vector.broadcast %cst_78 : f32 to vector<16x1xf32>
    %206 = arith.divf %204, %205 : vector<16x1xf32>
    %207 = vector.broadcast %206 : vector<16x1xf32> to vector<16x32xf32>
    %208 = arith.subf %198, %207 : vector<16x32xf32>
    %209 = arith.mulf %208, %208 : vector<16x32xf32>
    %cst_79 = arith.constant dense<0.000000e+00> : vector<16xf32>
    %210 = vector.multi_reduction <add>, %209, %cst_79 [1] : vector<16x32xf32> to vector<16xf32>
    %211 = vector.shape_cast %210 : vector<16xf32> to vector<16x1xf32>
    %cst_80 = arith.constant 3.200000e+01 : f32
    %212 = vector.broadcast %cst_80 : f32 to vector<16x1xf32>
    %213 = arith.divf %211, %212 : vector<16x1xf32>
    %cst_81 = arith.constant 9.99999996E-13 : f32
    %214 = vector.broadcast %cst_81 : f32 to vector<16x1xf32>
    %215 = arith.addf %213, %214 : vector<16x1xf32>
    %216 = math.rsqrt %215 : vector<16x1xf32>
    %217 = vector.broadcast %216 : vector<16x1xf32> to vector<16x32xf32>
    %218 = arith.mulf %208, %217 : vector<16x32xf32>
    %219 = vector.broadcast %200 : vector<1x32xf32> to vector<16x32xf32>
    %220 = arith.mulf %218, %219 : vector<16x32xf32>
    %221 = vector.broadcast %202 : vector<1x32xf32> to vector<16x32xf32>
    %222 = arith.addf %220, %221 : vector<16x32xf32>
    %c0_82 = arith.constant 0 : index
    %c0_83 = arith.constant 0 : index
    %223 = vector.load %arg20[%c0_82, %c0_83] : memref<16x32xf32, #tpu.memory_space<vmem>>, vector<16x32xf32>
    tpu.vector_store %arg20[%c0_82, %c0_83], %222 {strides = array<i32>} : memref<16x32xf32, #tpu.memory_space<vmem>>, vector<16x32xf32>,
    %c1_i32 = arith.constant 1 : i32
    %224 = arith.cmpi eq, %arg0, %c1_i32 : i32
    %225 = arith.extui %224 : i1 to i32
    %c0_i32_84 = arith.constant 0 : i32
    %226 = arith.cmpi ne, %225, %c0_i32_84 : i32
    scf.if %226 {
      %227 = arith.truncf %222 : vector<16x32xf32> to vector<16x32xbf16>
      %c0_85 = arith.constant 0 : index
      %c0_86 = arith.constant 0 : index
      %228 = vector.load %arg17[%c0_85, %c0_86] : memref<32x128xbf16, #tpu.memory_space<vmem>>, vector<32x128xbf16>
      %cst_87 = arith.constant dense<0.000000e+00> : vector<16x128xf32>
      %229 = tpu.matmul %227, %228, %cst_87 {dimension_numbers = #tpu.dot_dimension_numbers<[1], [0], [0], [1], [0, 0, 1, 1], [], []>} : vector<16x32xbf16>, vector<32x128xbf16>, vector<16x128xf32> -> vector<16x128xf32>
      %c0_88 = arith.constant 0 : index
      %c0_89 = arith.constant 0 : index
      %230 = vector.load %arg18[%c0_88, %c0_89] : memref<1x128xf32, #tpu.memory_space<vmem>>, vector<1x128xf32>
      %231 = vector.broadcast %230 : vector<1x128xf32> to vector<16x128xf32>
      %232 = arith.addf %229, %231 : vector<16x128xf32>
      %c0_90 = arith.constant 0 : index
      %c0_91 = arith.constant 0 : index
      %233 = vector.load %arg19[%c0_90, %c0_91] : memref<16x128xf32, #tpu.memory_space<vmem>>, vector<16x128xf32>
      tpu.vector_store %arg19[%c0_90, %c0_91], %232 {strides = array<i32>} : memref<16x128xf32, #tpu.memory_space<vmem>>, vector<16x128xf32>,
    } else {
    }
    return
  }
  func.func @transform_0(%arg0: i32) -> (i32, i32) {
    %c0_i32 = arith.constant 0 : i32
    %c0_i32_0 = arith.constant 0 : i32
    %c0_i32_1 = arith.constant 0 : i32
    return %c0_i32, %c0_i32_0 : i32, i32
  }
  func.func @transform_1(%arg0: i32) -> (i32, i32, i32) {
    %c0_i32 = arith.constant 0 : i32
    %c0_i32_0 = arith.constant 0 : i32
    %c0_i32_1 = arith.constant 0 : i32
    %c0_i32_2 = arith.constant 0 : i32
    return %c0_i32, %c0_i32_0, %c0_i32_1 : i32, i32, i32
  }
  func.func @transform_2(%arg0: i32) -> (i32, i32) {
    %c0_i32 = arith.constant 0 : i32
    %c0_i32_0 = arith.constant 0 : i32
    %c0_i32_1 = arith.constant 0 : i32
    return %c0_i32, %c0_i32_0 : i32, i32
  }
  func.func @transform_3(%arg0: i32) -> (i32, i32) {
    %c0_i32 = arith.constant 0 : i32
    %c0_i32_0 = arith.constant 0 : i32
    %c0_i32_1 = arith.constant 0 : i32
    return %c0_i32, %c0_i32_0 : i32, i32
  }
  func.func @transform_4(%arg0: i32) -> (i32, i32, i32) {
    %c0_i32 = arith.constant 0 : i32
    %c0_i32_0 = arith.constant 0 : i32
    %c0_i32_1 = arith.constant 0 : i32
    return %arg0, %c0_i32, %c0_i32_0 : i32, i32, i32
  }
  func.func @transform_5(%arg0: i32) -> (i32, i32, i32) {
    %c0_i32 = arith.constant 0 : i32
    %c0_i32_0 = arith.constant 0 : i32
    %c0_i32_1 = arith.constant 0 : i32
    return %arg0, %c0_i32, %c0_i32_0 : i32, i32, i32
  }
  func.func @transform_6(%arg0: i32) -> (i32, i32, i32) {
    %c0_i32 = arith.constant 0 : i32
    %c0_i32_0 = arith.constant 0 : i32
    %c0_i32_1 = arith.constant 0 : i32
    return %arg0, %c0_i32, %c0_i32_0 : i32, i32, i32
  }
  func.func @transform_7(%arg0: i32) -> (i32, i32, i32) {
    %c0_i32 = arith.constant 0 : i32
    %c0_i32_0 = arith.constant 0 : i32
    %c0_i32_1 = arith.constant 0 : i32
    return %arg0, %c0_i32, %c0_i32_0 : i32, i32, i32
  }
  func.func @transform_8(%arg0: i32) -> (i32, i32, i32) {
    %c0_i32 = arith.constant 0 : i32
    %c0_i32_0 = arith.constant 0 : i32
    %c0_i32_1 = arith.constant 0 : i32
    return %arg0, %c0_i32, %c0_i32_0 : i32, i32, i32
  }
  func.func @transform_9(%arg0: i32) -> (i32, i32, i32) {
    %c0_i32 = arith.constant 0 : i32
    %c0_i32_0 = arith.constant 0 : i32
    %c0_i32_1 = arith.constant 0 : i32
    return %arg0, %c0_i32, %c0_i32_0 : i32, i32, i32
  }
  func.func @transform_10(%arg0: i32) -> (i32, i32, i32) {
    %c0_i32 = arith.constant 0 : i32
    %c0_i32_0 = arith.constant 0 : i32
    %c0_i32_1 = arith.constant 0 : i32
    return %arg0, %c0_i32, %c0_i32_0 : i32, i32, i32
  }
  func.func @transform_11(%arg0: i32) -> (i32, i32, i32) {
    %c0_i32 = arith.constant 0 : i32
    %c0_i32_0 = arith.constant 0 : i32
    %c0_i32_1 = arith.constant 0 : i32
    return %arg0, %c0_i32, %c0_i32_0 : i32, i32, i32
  }
  func.func @transform_12(%arg0: i32) -> (i32, i32, i32) {
    %c0_i32 = arith.constant 0 : i32
    %c0_i32_0 = arith.constant 0 : i32
    %c0_i32_1 = arith.constant 0 : i32
    return %arg0, %c0_i32, %c0_i32_0 : i32, i32, i32
  }
  func.func @transform_13(%arg0: i32) -> (i32, i32, i32) {
    %c0_i32 = arith.constant 0 : i32
    %c0_i32_0 = arith.constant 0 : i32
    %c0_i32_1 = arith.constant 0 : i32
    return %arg0, %c0_i32, %c0_i32_0 : i32, i32, i32
  }
  func.func @transform_14(%arg0: i32) -> (i32, i32, i32) {
    %c0_i32 = arith.constant 0 : i32
    %c0_i32_0 = arith.constant 0 : i32
    %c0_i32_1 = arith.constant 0 : i32
    return %arg0, %c0_i32, %c0_i32_0 : i32, i32, i32
  }
  func.func @transform_15(%arg0: i32) -> (i32, i32, i32) {
    %c0_i32 = arith.constant 0 : i32
    %c0_i32_0 = arith.constant 0 : i32
    %c0_i32_1 = arith.constant 0 : i32
    return %arg0, %c0_i32, %c0_i32_0 : i32, i32, i32
  }
  func.func @transform_16(%arg0: i32) -> (i32, i32) {
    %c0_i32 = arith.constant 0 : i32
    %c0_i32_0 = arith.constant 0 : i32
    %c0_i32_1 = arith.constant 0 : i32
    return %c0_i32, %c0_i32_0 : i32, i32
  }
  func.func @transform_17(%arg0: i32) -> (i32, i32) {
    %c0_i32 = arith.constant 0 : i32
    %c0_i32_0 = arith.constant 0 : i32
    %c0_i32_1 = arith.constant 0 : i32
    return %c0_i32, %c0_i32_0 : i32, i32
  }
  func.func @transform_18(%arg0: i32) -> (i32, i32) {
    %c0_i32 = arith.constant 0 : i32
    %c0_i32_0 = arith.constant 0 : i32
    %c0_i32_1 = arith.constant 0 : i32
    return %c0_i32, %c0_i32_0 : i32, i32
  }
}

</mosaic_0001>

<llo_original>
// kernel: _lambda_.1
$region0: #{_lambda_.1}
  #allocation0 [shape = 'u32[]', space=smem, size = 0x4, offset = 0x4, fixed_abs, tag = 'smem constant byte address 0x4 - core index']
  #allocation1 [shape = 'u32[144,128]{1,0:T(1,128)}', space=vmem, size = 0x12000, scoped, tag = 'internal scratch']
  #allocation2 [shape = 'f32[16,32]{1,0:T(8,128)}', space=vmem, size = 0x2000, scoped, tag = 'scratch operand']
  %s0 = inlined_call_operand.vmem [shape: f32[16,32], index: 0, kind: input, shape index: {}]
  %s1 = inlined_call_operand.vmem [shape: f32[2,1,8], index: 1, kind: input, shape index: {}]
  %s2 = inlined_call_operand.vmem [shape: f32[1,32], index: 2, kind: input, shape index: {}]
  %s3 = inlined_call_operand.vmem [shape: f32[1,32], index: 3, kind: input, shape index: {}]
  %s4 = inlined_call_operand.vmem [shape: bf16[2,32,96], index: 4, kind: input, shape index: {}]
  %s5 = inlined_call_operand.vmem [shape: f32[2,1,96], index: 5, kind: input, shape index: {}]
  %s6 = inlined_call_operand.vmem [shape: bf16[2,32,32], index: 6, kind: input, shape index: {}]
  %s7 = inlined_call_operand.vmem [shape: f32[2,1,32], index: 7, kind: input, shape index: {}]
  %s8 = inlined_call_operand.vmem [shape: f32[2,1,32], index: 8, kind: input, shape index: {}]
  %s9 = inlined_call_operand.vmem [shape: f32[2,1,32], index: 9, kind: input, shape index: {}]
  %s10 = inlined_call_operand.vmem [shape: bf16[2,32,64], index: 10, kind: input, shape index: {}]
  %s11 = inlined_call_operand.vmem [shape: f32[2,1,64], index: 11, kind: input, shape index: {}]
  %s12 = inlined_call_operand.vmem [shape: bf16[2,64,32], index: 12, kind: input, shape index: {}]
  %s13 = inlined_call_operand.vmem [shape: f32[2,1,32], index: 13, kind: input, shape index: {}]
  %s14 = inlined_call_operand.vmem [shape: f32[2,1,32], index: 14, kind: input, shape index: {}]
  %s15 = inlined_call_operand.vmem [shape: f32[2,1,32], index: 15, kind: input, shape index: {}]
  %s16 = inlined_call_operand.vmem [shape: bf16[32,128], index: 16, kind: input, shape index: {}]
  %s17 = inlined_call_operand.vmem [shape: f32[1,128], index: 17, kind: input, shape index: {}]
  %s18 = inlined_call_operand.vmem [shape: f32[16,128], index: 18, kind: output, shape index: {}]
  %s19 = sld [smem:[#allocation0]]
  $region113: #{_lambda_.1} parent=0
    _
  %s21 = ssub.s32 1, %s19
  %s22 = scalar_select 0, %s21, %s19
  loop: start=0, step=1, limit=4
  $region2: #{_lambda_.1} parent=0 // loop_pre_header
    _
  $region3: #{_lambda_.1} parent=0 // loop_header
    %s24 = sphi 0, %s28
    %p25 = scmp.ge.s32.totalorder %s24, 4
    %s32 = sphi 0, %s32
    %s34 = sphi 0, %s32
    %s35 = sphi 0, %s34
    %s49 = sphi 0, %s35
    %s53 = sphi 0, %s53
    %s55 = sphi 0, %s53
    %s56 = sphi 0, %s55
    %s70 = sphi 0, %s56
    %s74 = sphi 0, %s74
    %s76 = sphi 0, %s74
    %s77 = sphi 0, %s76
    %s91 = sphi 0, %s77
    %s95 = sphi 0, %s95
    %s97 = sphi 0, %s95
    %s98 = sphi 0, %s97
    %s112 = sphi 0, %s98
    %s118 = sphi 0, %s120
    %s121 = sphi 0, %s118
    %s122 = sphi 0, %s121
    %s138 = sphi 0, %s122
    %s144 = sphi 0, %s146
    %s147 = sphi 0, %s144
    %s148 = sphi 0, %s147
    %s164 = sphi 0, %s148
    %s170 = sphi 0, %s172
    %s173 = sphi 0, %s170
    %s174 = sphi 0, %s173
    %s190 = sphi 0, %s174
    %s196 = sphi 0, %s198
    %s199 = sphi 0, %s196
    %s200 = sphi 0, %s199
    %s216 = sphi 0, %s200
    %s222 = sphi 0, %s224
    %s225 = sphi 0, %s222
    %s226 = sphi 0, %s225
    %s242 = sphi 0, %s226
    %s248 = sphi 0, %s250
    %s251 = sphi 0, %s248
    %s252 = sphi 0, %s251
    %s268 = sphi 0, %s252
    %s274 = sphi 0, %s276
    %s277 = sphi 0, %s274
    %s278 = sphi 0, %s277
    %s294 = sphi 0, %s278
    %s300 = sphi 0, %s302
    %s303 = sphi 0, %s300
    %s304 = sphi 0, %s303
    %s320 = sphi 0, %s304
    %s326 = sphi 0, %s328
    %s329 = sphi 0, %s326
    %s330 = sphi 0, %s329
    %s346 = sphi 0, %s330
    %s352 = sphi 0, %s354
    %s355 = sphi 0, %s352
    %s356 = sphi 0, %s355
    %s372 = sphi 0, %s356
    %s378 = sphi 0, %s380
    %s381 = sphi 0, %s378
    %s382 = sphi 0, %s381
    %s398 = sphi 0, %s382
    %s404 = sphi 0, %s406
    %s407 = sphi 0, %s404
    %s408 = sphi 0, %s407
    %s424 = sphi 0, %s408
    %s428 = sphi 0, %s428
    %s430 = sphi 0, %s428
    %s431 = sphi 0, %s430
    %s445 = sphi 0, %s431
    %s449 = sphi 0, %s449
    %s451 = sphi 0, %s449
    %s452 = sphi 0, %s451
    %s466 = sphi 0, %s452
    %s470 = sphi 0, %s470
    %s472 = sphi 0, %s470
    %s473 = sphi 0, %s472
    %s487 = sphi 0, %s473
  $region4: #{_lambda_.1} parent=0 // loop_header_branch
    %27 = sbr.rel (%p25) target = $region8
  $region5: #{_lambda_.1} parent=0 // loop_body
    %s29 = ssub.s32 %s24, 1
    %s30 = ssub.s32 %s24, 2
    %s31 = sadd.s32 %s24, 1
    %s33 = sadd.s32 %s32, 1
    %p36 = scmp.eq.s32.totalorder %s24, 1
    %p37 = scmp.ne.s32.totalorder %s32, %s34
    %p38 = scmp.eq.s32.totalorder %s24, 0
    %p39 = por %p37, %p38
    %p40 = scmp.ne.s32.totalorder %s32, %s34
    %p41 = scmp.eq.s32.totalorder %s29, 1
    %p42 = por %p40, %p41
    %p43 = scmp.ne.s32.totalorder %s34, %s35
    %p44 = scmp.eq.s32.totalorder %s29, 0
    %p45 = por %p43, %p44
    %p46 = scmp.ne.s32.totalorder %s34, %s35
    %p47 = scmp.eq.s32.totalorder %s30, 1
    %p48 = por %p46, %p47
    %p50 = scmp.ne.s32.totalorder %s35, %s49
    %p51 = scmp.eq.s32.totalorder %s30, 0
    %p52 = por %p50, %p51
    %s54 = sadd.s32 %s53, 1
    %p57 = scmp.eq.s32.totalorder %s24, 1
    %p58 = scmp.ne.s32.totalorder %s53, %s55
    %p59 = scmp.eq.s32.totalorder %s24, 0
    %p60 = por %p58, %p59
    %p61 = scmp.ne.s32.totalorder %s53, %s55
    %p62 = scmp.eq.s32.totalorder %s29, 1
    %p63 = por %p61, %p62
    %p64 = scmp.ne.s32.totalorder %s55, %s56
    %p65 = scmp.eq.s32.totalorder %s29, 0
    %p66 = por %p64, %p65
    %p67 = scmp.ne.s32.totalorder %s55, %s56
    %p68 = scmp.eq.s32.totalorder %s30, 1
    %p69 = por %p67, %p68
    %p71 = scmp.ne.s32.totalorder %s56, %s70
    %p72 = scmp.eq.s32.totalorder %s30, 0
    %p73 = por %p71, %p72
    %s75 = sadd.s32 %s74, 1
    %p78 = scmp.eq.s32.totalorder %s24, 1
    %p79 = scmp.ne.s32.totalorder %s74, %s76
    %p80 = scmp.eq.s32.totalorder %s24, 0
    %p81 = por %p79, %p80
    %p82 = scmp.ne.s32.totalorder %s74, %s76
    %p83 = scmp.eq.s32.totalorder %s29, 1
    %p84 = por %p82, %p83
    %p85 = scmp.ne.s32.totalorder %s76, %s77
    %p86 = scmp.eq.s32.totalorder %s29, 0
    %p87 = por %p85, %p86
    %p88 = scmp.ne.s32.totalorder %s76, %s77
    %p89 = scmp.eq.s32.totalorder %s30, 1
    %p90 = por %p88, %p89
    %p92 = scmp.ne.s32.totalorder %s77, %s91
    %p93 = scmp.eq.s32.totalorder %s30, 0
    %p94 = por %p92, %p93
    %s96 = sadd.s32 %s95, 1
    %p99 = scmp.eq.s32.totalorder %s24, 1
    %p100 = scmp.ne.s32.totalorder %s95, %s97
    %p101 = scmp.eq.s32.totalorder %s24, 0
    %p102 = por %p100, %p101
    %p103 = scmp.ne.s32.totalorder %s95, %s97
    %p104 = scmp.eq.s32.totalorder %s29, 1
    %p105 = por %p103, %p104
    %p106 = scmp.ne.s32.totalorder %s97, %s98
    %p107 = scmp.eq.s32.totalorder %s29, 0
    %p108 = por %p106, %p107
    %p109 = scmp.ne.s32.totalorder %s97, %s98
    %p110 = scmp.eq.s32.totalorder %s30, 1
    %p111 = por %p109, %p110
    %p113 = scmp.ne.s32.totalorder %s98, %s112
    %p114 = scmp.eq.s32.totalorder %s30, 0
    %p115 = por %p113, %p114
    %s116 = ssub.s32 %s24, %s31
    %p117 = scmp.eq.s32.totalorder %s116, 0
    %s119 = sadd.s32 %s118, 1
    %s120 = scalar_select %p117, %s118, %s119
    %p123 = pneg %p117
    %p124 = scmp.eq.s32.totalorder %s24, 1
    %p125 = por %p123, %p124
    %p126 = scmp.ne.s32.totalorder %s118, %s121
    %p127 = scmp.eq.s32.totalorder %s24, 0
    %p128 = por %p126, %p127
    %p129 = scmp.ne.s32.totalorder %s118, %s121
    %p130 = scmp.eq.s32.totalorder %s29, 1
    %p131 = por %p129, %p130
    %p132 = scmp.ne.s32.totalorder %s121, %s122
    %p133 = scmp.eq.s32.totalorder %s29, 0
    %p134 = por %p132, %p133
    %p135 = scmp.ne.s32.totalorder %s121, %s122
    %p136 = scmp.eq.s32.totalorder %s30, 1
    %p137 = por %p135, %p136
    %p139 = scmp.ne.s32.totalorder %s122, %s138
    %p140 = scmp.eq.s32.totalorder %s30, 0
    %p141 = por %p139, %p140
    %s142 = ssub.s32 %s24, %s31
    %p143 = scmp.eq.s32.totalorder %s142, 0
    %s145 = sadd.s32 %s144, 1
    %s146 = scalar_select %p143, %s144, %s145
    %p149 = pneg %p143
    %p150 = scmp.eq.s32.totalorder %s24, 1
    %p151 = por %p149, %p150
    %p152 = scmp.ne.s32.totalorder %s144, %s147
    %p153 = scmp.eq.s32.totalorder %s24, 0
    %p154 = por %p152, %p153
    %p155 = scmp.ne.s32.totalorder %s144, %s147
    %p156 = scmp.eq.s32.totalorder %s29, 1
    %p157 = por %p155, %p156
    %p158 = scmp.ne.s32.totalorder %s147, %s148
    %p159 = scmp.eq.s32.totalorder %s29, 0
    %p160 = por %p158, %p159
    %p161 = scmp.ne.s32.totalorder %s147, %s148
    %p162 = scmp.eq.s32.totalorder %s30, 1
    %p163 = por %p161, %p162
    %p165 = scmp.ne.s32.totalorder %s148, %s164
    %p166 = scmp.eq.s32.totalorder %s30, 0
    %p167 = por %p165, %p166
    %s168 = ssub.s32 %s24, %s31
    %p169 = scmp.eq.s32.totalorder %s168, 0
    %s171 = sadd.s32 %s170, 1
    %s172 = scalar_select %p169, %s170, %s171
    %p175 = pneg %p169
    %p176 = scmp.eq.s32.totalorder %s24, 1
    %p177 = por %p175, %p176
    %p178 = scmp.ne.s32.totalorder %s170, %s173
    %p179 = scmp.eq.s32.totalorder %s24, 0
    %p180 = por %p178, %p179
    %p181 = scmp.ne.s32.totalorder %s170, %s173
    %p182 = scmp.eq.s32.totalorder %s29, 1
    %p183 = por %p181, %p182
    %p184 = scmp.ne.s32.totalorder %s173, %s174
    %p185 = scmp.eq.s32.totalorder %s29, 0
    %p186 = por %p184, %p185
    %p187 = scmp.ne.s32.totalorder %s173, %s174
    %p188 = scmp.eq.s32.totalorder %s30, 1
    %p189 = por %p187, %p188
    %p191 = scmp.ne.s32.totalorder %s174, %s190
    %p192 = scmp.eq.s32.totalorder %s30, 0
    %p193 = por %p191, %p192
    %s194 = ssub.s32 %s24, %s31
    %p195 = scmp.eq.s32.totalorder %s194, 0
    %s197 = sadd.s32 %s196, 1
    %s198 = scalar_select %p195, %s196, %s197
    %p201 = pneg %p195
    %p202 = scmp.eq.s32.totalorder %s24, 1
    %p203 = por %p201, %p202
    %p204 = scmp.ne.s32.totalorder %s196, %s199
    %p205 = scmp.eq.s32.totalorder %s24, 0
    %p206 = por %p204, %p205
    %p207 = scmp.ne.s32.totalorder %s196, %s199
    %p208 = scmp.eq.s32.totalorder %s29, 1
    %p209 = por %p207, %p208
    %p210 = scmp.ne.s32.totalorder %s199, %s200
    %p211 = scmp.eq.s32.totalorder %s29, 0
    %p212 = por %p210, %p211
    %p213 = scmp.ne.s32.totalorder %s199, %s200
    %p214 = scmp.eq.s32.totalorder %s30, 1
    %p215 = por %p213, %p214
    %p217 = scmp.ne.s32.totalorder %s200, %s216
    %p218 = scmp.eq.s32.totalorder %s30, 0
    %p219 = por %p217, %p218
    %s220 = ssub.s32 %s24, %s31
    %p221 = scmp.eq.s32.totalorder %s220, 0
    %s223 = sadd.s32 %s222, 1
    %s224 = scalar_select %p221, %s222, %s223
    %p227 = pneg %p221
    %p228 = scmp.eq.s32.totalorder %s24, 1
    %p229 = por %p227, %p228
    %p230 = scmp.ne.s32.totalorder %s222, %s225
    %p231 = scmp.eq.s32.totalorder %s24, 0
    %p232 = por %p230, %p231
    %p233 = scmp.ne.s32.totalorder %s222, %s225
    %p234 = scmp.eq.s32.totalorder %s29, 1
    %p235 = por %p233, %p234
    %p236 = scmp.ne.s32.totalorder %s225, %s226
    %p237 = scmp.eq.s32.totalorder %s29, 0
    %p238 = por %p236, %p237
    %p239 = scmp.ne.s32.totalorder %s225, %s226
    %p240 = scmp.eq.s32.totalorder %s30, 1
    %p241 = por %p239, %p240
    %p243 = scmp.ne.s32.totalorder %s226, %s242
    %p244 = scmp.eq.s32.totalorder %s30, 0
    %p245 = por %p243, %p244
    %s246 = ssub.s32 %s24, %s31
    %p247 = scmp.eq.s32.totalorder %s246, 0
    %s249 = sadd.s32 %s248, 1
    %s250 = scalar_select %p247, %s248, %s249
    %p253 = pneg %p247
    %p254 = scmp.eq.s32.totalorder %s24, 1
    %p255 = por %p253, %p254
    %p256 = scmp.ne.s32.totalorder %s248, %s251
    %p257 = scmp.eq.s32.totalorder %s24, 0
    %p258 = por %p256, %p257
    %p259 = scmp.ne.s32.totalorder %s248, %s251
    %p260 = scmp.eq.s32.totalorder %s29, 1
    %p261 = por %p259, %p260
    %p262 = scmp.ne.s32.totalorder %s251, %s252
    %p263 = scmp.eq.s32.totalorder %s29, 0
    %p264 = por %p262, %p263
    %p265 = scmp.ne.s32.totalorder %s251, %s252
    %p266 = scmp.eq.s32.totalorder %s30, 1
    %p267 = por %p265, %p266
    %p269 = scmp.ne.s32.totalorder %s252, %s268
    %p270 = scmp.eq.s32.totalorder %s30, 0
    %p271 = por %p269, %p270
    %s272 = ssub.s32 %s24, %s31
    %p273 = scmp.eq.s32.totalorder %s272, 0
    %s275 = sadd.s32 %s274, 1
    %s276 = scalar_select %p273, %s274, %s275
    %p279 = pneg %p273
    %p280 = scmp.eq.s32.totalorder %s24, 1
    %p281 = por %p279, %p280
    %p282 = scmp.ne.s32.totalorder %s274, %s277
    %p283 = scmp.eq.s32.totalorder %s24, 0
    %p284 = por %p282, %p283
    %p285 = scmp.ne.s32.totalorder %s274, %s277
    %p286 = scmp.eq.s32.totalorder %s29, 1
    %p287 = por %p285, %p286
    %p288 = scmp.ne.s32.totalorder %s277, %s278
    %p289 = scmp.eq.s32.totalorder %s29, 0
    %p290 = por %p288, %p289
    %p291 = scmp.ne.s32.totalorder %s277, %s278
    %p292 = scmp.eq.s32.totalorder %s30, 1
    %p293 = por %p291, %p292
    %p295 = scmp.ne.s32.totalorder %s278, %s294
    %p296 = scmp.eq.s32.totalorder %s30, 0
    %p297 = por %p295, %p296
    %s298 = ssub.s32 %s24, %s31
    %p299 = scmp.eq.s32.totalorder %s298, 0
    %s301 = sadd.s32 %s300, 1
    %s302 = scalar_select %p299, %s300, %s301
    %p305 = pneg %p299
    %p306 = scmp.eq.s32.totalorder %s24, 1
    %p307 = por %p305, %p306
    %p308 = scmp.ne.s32.totalorder %s300, %s303
    %p309 = scmp.eq.s32.totalorder %s24, 0
    %p310 = por %p308, %p309
    %p311 = scmp.ne.s32.totalorder %s300, %s303
    %p312 = scmp.eq.s32.totalorder %s29, 1
    %p313 = por %p311, %p312
    %p314 = scmp.ne.s32.totalorder %s303, %s304
    %p315 = scmp.eq.s32.totalorder %s29, 0
    %p316 = por %p314, %p315
    %p317 = scmp.ne.s32.totalorder %s303, %s304
    %p318 = scmp.eq.s32.totalorder %s30, 1
    %p319 = por %p317, %p318
    %p321 = scmp.ne.s32.totalorder %s304, %s320
    %p322 = scmp.eq.s32.totalorder %s30, 0
    %p323 = por %p321, %p322
    %s324 = ssub.s32 %s24, %s31
    %p325 = scmp.eq.s32.totalorder %s324, 0
    %s327 = sadd.s32 %s326, 1
    %s328 = scalar_select %p325, %s326, %s327
    %p331 = pneg %p325
    %p332 = scmp.eq.s32.totalorder %s24, 1
    %p333 = por %p331, %p332
    %p334 = scmp.ne.s32.totalorder %s326, %s329
    %p335 = scmp.eq.s32.totalorder %s24, 0
    %p336 = por %p334, %p335
    %p337 = scmp.ne.s32.totalorder %s326, %s329
    %p338 = scmp.eq.s32.totalorder %s29, 1
    %p339 = por %p337, %p338
    %p340 = scmp.ne.s32.totalorder %s329, %s330
    %p341 = scmp.eq.s32.totalorder %s29, 0
    %p342 = por %p340, %p341
    %p343 = scmp.ne.s32.totalorder %s329, %s330
    %p344 = scmp.eq.s32.totalorder %s30, 1
    %p345 = por %p343, %p344
    %p347 = scmp.ne.s32.totalorder %s330, %s346
    %p348 = scmp.eq.s32.totalorder %s30, 0
    %p349 = por %p347, %p348
    %s350 = ssub.s32 %s24, %s31
    %p351 = scmp.eq.s32.totalorder %s350, 0
    %s353 = sadd.s32 %s352, 1
    %s354 = scalar_select %p351, %s352, %s353
    %p357 = pneg %p351
    %p358 = scmp.eq.s32.totalorder %s24, 1
    %p359 = por %p357, %p358
    %p360 = scmp.ne.s32.totalorder %s352, %s355
    %p361 = scmp.eq.s32.totalorder %s24, 0
    %p362 = por %p360, %p361
    %p363 = scmp.ne.s32.totalorder %s352, %s355
    %p364 = scmp.eq.s32.totalorder %s29, 1
    %p365 = por %p363, %p364
    %p366 = scmp.ne.s32.totalorder %s355, %s356
    %p367 = scmp.eq.s32.totalorder %s29, 0
    %p368 = por %p366, %p367
    %p369 = scmp.ne.s32.totalorder %s355, %s356
    %p370 = scmp.eq.s32.totalorder %s30, 1
    %p371 = por %p369, %p370
    %p373 = scmp.ne.s32.totalorder %s356, %s372
    %p374 = scmp.eq.s32.totalorder %s30, 0
    %p375 = por %p373, %p374
    %s376 = ssub.s32 %s24, %s31
    %p377 = scmp.eq.s32.totalorder %s376, 0
    %s379 = sadd.s32 %s378, 1
    %s380 = scalar_select %p377, %s378, %s379
    %p383 = pneg %p377
    %p384 = scmp.eq.s32.totalorder %s24, 1
    %p385 = por %p383, %p384
    %p386 = scmp.ne.s32.totalorder %s378, %s381
    %p387 = scmp.eq.s32.totalorder %s24, 0
    %p388 = por %p386, %p387
    %p389 = scmp.ne.s32.totalorder %s378, %s381
    %p390 = scmp.eq.s32.totalorder %s29, 1
    %p391 = por %p389, %p390
    %p392 = scmp.ne.s32.totalorder %s381, %s382
    %p393 = scmp.eq.s32.totalorder %s29, 0
    %p394 = por %p392, %p393
    %p395 = scmp.ne.s32.totalorder %s381, %s382
    %p396 = scmp.eq.s32.totalorder %s30, 1
    %p397 = por %p395, %p396
    %p399 = scmp.ne.s32.totalorder %s382, %s398
    %p400 = scmp.eq.s32.totalorder %s30, 0
    %p401 = por %p399, %p400
    %s402 = ssub.s32 %s24, %s31
    %p403 = scmp.eq.s32.totalorder %s402, 0
    %s405 = sadd.s32 %s404, 1
    %s406 = scalar_select %p403, %s404, %s405
    %p409 = pneg %p403
    %p410 = scmp.eq.s32.totalorder %s24, 1
    %p411 = por %p409, %p410
    %p412 = scmp.ne.s32.totalorder %s404, %s407
    %p413 = scmp.eq.s32.totalorder %s24, 0
    %p414 = por %p412, %p413
    %p415 = scmp.ne.s32.totalorder %s404, %s407
    %p416 = scmp.eq.s32.totalorder %s29, 1
    %p417 = por %p415, %p416
    %p418 = scmp.ne.s32.totalorder %s407, %s408
    %p419 = scmp.eq.s32.totalorder %s29, 0
    %p420 = por %p418, %p419
    %p421 = scmp.ne.s32.totalorder %s407, %s408
    %p422 = scmp.eq.s32.totalorder %s30, 1
    %p423 = por %p421, %p422
    %p425 = scmp.ne.s32.totalorder %s408, %s424
    %p426 = scmp.eq.s32.totalorder %s30, 0
    %p427 = por %p425, %p426
    %s429 = sadd.s32 %s428, 1
    %p432 = scmp.eq.s32.totalorder %s24, 1
    %p433 = scmp.ne.s32.totalorder %s428, %s430
    %p434 = scmp.eq.s32.totalorder %s24, 0
    %p435 = por %p433, %p434
    %p436 = scmp.ne.s32.totalorder %s428, %s430
    %p437 = scmp.eq.s32.totalorder %s29, 1
    %p438 = por %p436, %p437
    %p439 = scmp.ne.s32.totalorder %s430, %s431
    %p440 = scmp.eq.s32.totalorder %s29, 0
    %p441 = por %p439, %p440
    %p442 = scmp.ne.s32.totalorder %s430, %s431
    %p443 = scmp.eq.s32.totalorder %s30, 1
    %p444 = por %p442, %p443
    %p446 = scmp.ne.s32.totalorder %s431, %s445
    %p447 = scmp.eq.s32.totalorder %s30, 0
    %p448 = por %p446, %p447
    %s450 = sadd.s32 %s449, 1
    %p453 = scmp.eq.s32.totalorder %s24, 1
    %p454 = scmp.ne.s32.totalorder %s449, %s451
    %p455 = scmp.eq.s32.totalorder %s24, 0
    %p456 = por %p454, %p455
    %p457 = scmp.ne.s32.totalorder %s449, %s451
    %p458 = scmp.eq.s32.totalorder %s29, 1
    %p459 = por %p457, %p458
    %p460 = scmp.ne.s32.totalorder %s451, %s452
    %p461 = scmp.eq.s32.totalorder %s29, 0
    %p462 = por %p460, %p461
    %p463 = scmp.ne.s32.totalorder %s451, %s452
    %p464 = scmp.eq.s32.totalorder %s30, 1
    %p465 = por %p463, %p464
    %p467 = scmp.ne.s32.totalorder %s452, %s466
    %p468 = scmp.eq.s32.totalorder %s30, 0
    %p469 = por %p467, %p468
    %s471 = sadd.s32 %s470, 1
    %p474 = scmp.eq.s32.totalorder %s24, 1
    %p475 = scmp.ne.s32.totalorder %s470, %s472
    %p476 = scmp.eq.s32.totalorder %s24, 0
    %p477 = por %p475, %p476
    %p478 = scmp.ne.s32.totalorder %s470, %s472
    %p479 = scmp.eq.s32.totalorder %s29, 1
    %p480 = por %p478, %p479
    %p481 = scmp.ne.s32.totalorder %s472, %s473
    %p482 = scmp.eq.s32.totalorder %s29, 0
    %p483 = por %p481, %p482
    %p484 = scmp.ne.s32.totalorder %s472, %s473
    %p485 = scmp.eq.s32.totalorder %s30, 1
    %p486 = por %p484, %p485
    %p488 = scmp.ne.s32.totalorder %s473, %s487
    %p489 = scmp.eq.s32.totalorder %s30, 0
    %p490 = por %p488, %p489
    %p491 = scmp.le.s32.totalorder 1, %s24
    %p492 = scmp.lt.s32.totalorder %s24, 3
    %p493 = pnand %p491, %p492
    %p494 = pneg %p493
    // Predicated region
    $region9: #{_lambda_.1} parent=5 // pred_check
      _
    $region10: #{_lambda_.1} parent=5 // pred_check_branch
      %496 = sbr.rel (%p493) target = $region12
    $region11: #{_lambda_.1} parent=5 // pred_region
      %s497 = ssub.s32 %s24, 1
      // Predicated region
      $region13: #{_lambda_.1} parent=11 // pred_check
        %p498 = pneg %p45
      $region14: #{_lambda_.1} parent=11 // pred_check_branch
        %500 = sbr.rel (%p498) target = $region16
      $region15: #{_lambda_.1} parent=11 // pred_region
        _
      $region16: #{_lambda_.1} parent=11 // pred_fallthru
        _
      // Predicated region
      $region17: #{_lambda_.1} parent=11 // pred_check
        %p501 = pneg %p66
      $region18: #{_lambda_.1} parent=11 // pred_check_branch
        %503 = sbr.rel (%p501) target = $region20
      $region19: #{_lambda_.1} parent=11 // pred_region
        _
      $region20: #{_lambda_.1} parent=11 // pred_fallthru
        _
      // Predicated region
      $region21: #{_lambda_.1} parent=11 // pred_check
        %p504 = pneg %p87
      $region22: #{_lambda_.1} parent=11 // pred_check_branch
        %506 = sbr.rel (%p504) target = $region24
      $region23: #{_lambda_.1} parent=11 // pred_region
        _
      $region24: #{_lambda_.1} parent=11 // pred_fallthru
        _
      // Predicated region
      $region25: #{_lambda_.1} parent=11 // pred_check
        %p507 = pneg %p108
      $region26: #{_lambda_.1} parent=11 // pred_check_branch
        %509 = sbr.rel (%p507) target = $region28
      $region27: #{_lambda_.1} parent=11 // pred_region
        _
      $region28: #{_lambda_.1} parent=11 // pred_fallthru
        _
      // Predicated region
      $region29: #{_lambda_.1} parent=11 // pred_check
        %p510 = pneg %p441
      $region30: #{_lambda_.1} parent=11 // pred_check_branch
        %512 = sbr.rel (%p510) target = $region32
      $region31: #{_lambda_.1} parent=11 // pred_region
        _
      $region32: #{_lambda_.1} parent=11 // pred_fallthru
        _
      // Predicated region
      $region33: #{_lambda_.1} parent=11 // pred_check
        %p513 = pneg %p462
      $region34: #{_lambda_.1} parent=11 // pred_check_branch
        %515 = sbr.rel (%p513) target = $region36
      $region35: #{_lambda_.1} parent=11 // pred_region
        _
      $region36: #{_lambda_.1} parent=11 // pred_fallthru
        _
    $region12: #{_lambda_.1} parent=5 // pred_fallthru
      _
    %p516 = scmp.lt.s32.totalorder %s24, 2
    // Predicated region
    $region37: #{_lambda_.1} parent=5 // pred_check
      %p517 = pneg %p516
    $region38: #{_lambda_.1} parent=5 // pred_check_branch
      %519 = sbr.rel (%p517) target = $region40
    $region39: #{_lambda_.1} parent=5 // pred_region
      // Predicated region
      $region41: #{_lambda_.1} parent=39 // pred_check
        %p520 = pneg %p128
      $region42: #{_lambda_.1} parent=39 // pred_check_branch
        %522 = sbr.rel (%p520) target = $region44
      $region43: #{_lambda_.1} parent=39 // pred_region
        %p523 = scmp.lt.s32.totalorder %s24, 1
        %s524 = scalar_select %p523, %s24, 1
        %s525 = smul.addr %s524, 4
        %s526 = smul.addr %s525, 4
        %s527 = scalar_lea.vmem %s4, %s526
      $region44: #{_lambda_.1} parent=39 // pred_fallthru
        _
      // Predicated region
      $region45: #{_lambda_.1} parent=39 // pred_check
        %p528 = pneg %p154
      $region46: #{_lambda_.1} parent=39 // pred_check_branch
        %530 = sbr.rel (%p528) target = $region48
      $region47: #{_lambda_.1} parent=39 // pred_region
        %p531 = scmp.lt.s32.totalorder %s24, 1
        %s532 = scalar_select %p531, %s24, 1
        %s533 = scalar_lea.vmem %s5, %s532
      $region48: #{_lambda_.1} parent=39 // pred_fallthru
        _
      // Predicated region
      $region49: #{_lambda_.1} parent=39 // pred_check
        %p534 = pneg %p180
      $region50: #{_lambda_.1} parent=39 // pred_check_branch
        %536 = sbr.rel (%p534) target = $region52
      $region51: #{_lambda_.1} parent=39 // pred_region
        %p537 = scmp.lt.s32.totalorder %s24, 1
        %s538 = scalar_select %p537, %s24, 1
        %s539 = smul.addr %s538, 4
        %s540 = smul.addr %s539, 4
        %s541 = scalar_lea.vmem %s6, %s540
      $region52: #{_lambda_.1} parent=39 // pred_fallthru
        _
      // Predicated region
      $region53: #{_lambda_.1} parent=39 // pred_check
        %p542 = pneg %p206
      $region54: #{_lambda_.1} parent=39 // pred_check_branch
        %544 = sbr.rel (%p542) target = $region56
      $region55: #{_lambda_.1} parent=39 // pred_region
        %p545 = scmp.lt.s32.totalorder %s24, 1
        %s546 = scalar_select %p545, %s24, 1
        %s547 = scalar_lea.vmem %s7, %s546
      $region56: #{_lambda_.1} parent=39 // pred_fallthru
        _
      // Predicated region
      $region57: #{_lambda_.1} parent=39 // pred_check
        %p548 = pneg %p232
      $region58: #{_lambda_.1} parent=39 // pred_check_branch
        %550 = sbr.rel (%p548) target = $region60
      $region59: #{_lambda_.1} parent=39 // pred_region
        %p551 = scmp.lt.s32.totalorder %s24, 1
        %s552 = scalar_select %p551, %s24, 1
        %s553 = scalar_lea.vmem %s8, %s552
      $region60: #{_lambda_.1} parent=39 // pred_fallthru
        _
      // Predicated region
      $region61: #{_lambda_.1} parent=39 // pred_check
        %p554 = pneg %p258
      $region62: #{_lambda_.1} parent=39 // pred_check_branch
        %556 = sbr.rel (%p554) target = $region64
      $region63: #{_lambda_.1} parent=39 // pred_region
        %p557 = scmp.lt.s32.totalorder %s24, 1
        %s558 = scalar_select %p557, %s24, 1
        %s559 = scalar_lea.vmem %s9, %s558
      $region64: #{_lambda_.1} parent=39 // pred_fallthru
        _
      // Predicated region
      $region65: #{_lambda_.1} parent=39 // pred_check
        %p560 = pneg %p284
      $region66: #{_lambda_.1} parent=39 // pred_check_branch
        %562 = sbr.rel (%p560) target = $region68
      $region67: #{_lambda_.1} parent=39 // pred_region
        %p563 = scmp.lt.s32.totalorder %s24, 1
        %s564 = scalar_select %p563, %s24, 1
        %s565 = smul.addr %s564, 4
        %s566 = smul.addr %s565, 4
        %s567 = scalar_lea.vmem %s10, %s566
      $region68: #{_lambda_.1} parent=39 // pred_fallthru
        _
      // Predicated region
      $region69: #{_lambda_.1} parent=39 // pred_check
        %p568 = pneg %p310
      $region70: #{_lambda_.1} parent=39 // pred_check_branch
        %570 = sbr.rel (%p568) target = $region72
      $region71: #{_lambda_.1} parent=39 // pred_region
        %p571 = scmp.lt.s32.totalorder %s24, 1
        %s572 = scalar_select %p571, %s24, 1
        %s573 = scalar_lea.vmem %s11, %s572
      $region72: #{_lambda_.1} parent=39 // pred_fallthru
        _
      // Predicated region
      $region73: #{_lambda_.1} parent=39 // pred_check
        %p574 = pneg %p336
      $region74: #{_lambda_.1} parent=39 // pred_check_branch
        %576 = sbr.rel (%p574) target = $region76
      $region75: #{_lambda_.1} parent=39 // pred_region
        %p577 = scmp.lt.s32.totalorder %s24, 1
        %s578 = scalar_select %p577, %s24, 1
        %s579 = smul.addr %s578, 8
        %s580 = smul.addr %s579, 4
        %s581 = scalar_lea.vmem %s12, %s580
      $region76: #{_lambda_.1} parent=39 // pred_fallthru
        _
      // Predicated region
      $region77: #{_lambda_.1} parent=39 // pred_check
        %p582 = pneg %p362
      $region78: #{_lambda_.1} parent=39 // pred_check_branch
        %584 = sbr.rel (%p582) target = $region80
      $region79: #{_lambda_.1} parent=39 // pred_region
        %p585 = scmp.lt.s32.totalorder %s24, 1
        %s586 = scalar_select %p585, %s24, 1
        %s587 = scalar_lea.vmem %s13, %s586
      $region80: #{_lambda_.1} parent=39 // pred_fallthru
        _
      // Predicated region
      $region81: #{_lambda_.1} parent=39 // pred_check
        %p588 = pneg %p388
      $region82: #{_lambda_.1} parent=39 // pred_check_branch
        %590 = sbr.rel (%p588) target = $region84
      $region83: #{_lambda_.1} parent=39 // pred_region
        %p591 = scmp.lt.s32.totalorder %s24, 1
        %s592 = scalar_select %p591, %s24, 1
        %s593 = scalar_lea.vmem %s14, %s592
      $region84: #{_lambda_.1} parent=39 // pred_fallthru
        _
      // Predicated region
      $region85: #{_lambda_.1} parent=39 // pred_check
        %p594 = pneg %p414
      $region86: #{_lambda_.1} parent=39 // pred_check_branch
        %596 = sbr.rel (%p594) target = $region88
      $region87: #{_lambda_.1} parent=39 // pred_region
        %p597 = scmp.lt.s32.totalorder %s24, 1
        %s598 = scalar_select %p597, %s24, 1
        %s599 = scalar_lea.vmem %s15, %s598
      $region88: #{_lambda_.1} parent=39 // pred_fallthru
        _
    $region40: #{_lambda_.1} parent=5 // pred_fallthru
      _
    %p600 = scmp.le.s32.totalorder 1, %s24
    %p601 = scmp.lt.s32.totalorder %s24, 3
    %p602 = pnand %p600, %p601
    %p603 = pneg %p602
    // Predicated region
    $region89: #{_lambda_.1} parent=5 // pred_check
      _
    $region90: #{_lambda_.1} parent=5 // pred_check_branch
      %605 = sbr.rel (%p602) target = $region92
    $region91: #{_lambda_.1} parent=5 // pred_region
      %s606 = ssub.s32 %s24, 1
      %p607 = pneg %p45
      %p608 = pneg %p42
      %p609 = pneg %p66
      %p610 = pneg %p63
      %p611 = pneg %p87
      %p612 = pneg %p84
      %p613 = pneg %p108
      %p614 = pneg %p105
      %p615 = scmp.lt.s32.totalorder %s29, 1
      %s616 = scalar_select %p615, %s29, 1
      %s617 = smul.addr %s616, 4
      %s618 = smul.addr %s617, 4
      %s619 = scalar_lea.vmem %s4, %s618
      %p620 = pneg %p134
      %p621 = pneg %p131
      %p622 = scmp.lt.s32.totalorder %s29, 1
      %s623 = scalar_select %p622, %s29, 1
      %s624 = scalar_lea.vmem %s5, %s623
      %p625 = pneg %p160
      %p626 = pneg %p157
      %p627 = scmp.lt.s32.totalorder %s29, 1
      %s628 = scalar_select %p627, %s29, 1
      %s629 = smul.addr %s628, 4
      %s630 = smul.addr %s629, 4
      %s631 = scalar_lea.vmem %s6, %s630
      %p632 = pneg %p186
      %p633 = pneg %p183
      %p634 = scmp.lt.s32.totalorder %s29, 1
      %s635 = scalar_select %p634, %s29, 1
      %s636 = scalar_lea.vmem %s7, %s635
      %p637 = pneg %p212
      %p638 = pneg %p209
      %p639 = scmp.lt.s32.totalorder %s29, 1
      %s640 = scalar_select %p639, %s29, 1
      %s641 = scalar_lea.vmem %s8, %s640
      %p642 = pneg %p238
      %p643 = pneg %p235
      %p644 = scmp.lt.s32.totalorder %s29, 1
      %s645 = scalar_select %p644, %s29, 1
      %s646 = scalar_lea.vmem %s9, %s645
      %p647 = pneg %p264
      %p648 = pneg %p261
      %p649 = scmp.lt.s32.totalorder %s29, 1
      %s650 = scalar_select %p649, %s29, 1
      %s651 = smul.addr %s650, 4
      %s652 = smul.addr %s651, 4
      %s653 = scalar_lea.vmem %s10, %s652
      %p654 = pneg %p290
      %p655 = pneg %p287
      %p656 = scmp.lt.s32.totalorder %s29, 1
      %s657 = scalar_select %p656, %s29, 1
      %s658 = scalar_lea.vmem %s11, %s657
      %p659 = pneg %p316
      %p660 = pneg %p313
      %p661 = scmp.lt.s32.totalorder %s29, 1
      %s662 = scalar_select %p661, %s29, 1
      %s663 = smul.addr %s662, 8
      %s664 = smul.addr %s663, 4
      %s665 = scalar_lea.vmem %s12, %s664
      %p666 = pneg %p342
      %p667 = pneg %p339
      %p668 = scmp.lt.s32.totalorder %s29, 1
      %s669 = scalar_select %p668, %s29, 1
      %s670 = scalar_lea.vmem %s13, %s669
      %p671 = pneg %p368
      %p672 = pneg %p365
      %p673 = scmp.lt.s32.totalorder %s29, 1
      %s674 = scalar_select %p673, %s29, 1
      %s675 = scalar_lea.vmem %s14, %s674
      %p676 = pneg %p394
      %p677 = pneg %p391
      %p678 = scmp.lt.s32.totalorder %s29, 1
      %s679 = scalar_select %p678, %s29, 1
      %s680 = scalar_lea.vmem %s15, %s679
      %p681 = pneg %p420
      %p682 = pneg %p417
      %p683 = pneg %p441
      %p684 = pneg %p438
      %p685 = pneg %p462
      %p686 = pneg %p459
      %p687 = pneg %p483
      %p688 = pneg %p480
      %p689 = scmp.lt.s32.totalorder %s29, 1
      %s690 = scalar_select %p689, %s29, 1
      %s691 = smul.addr %s690, 4
      %s692 = smul.addr %s691, 4
      %s693 = scalar_lea.vmem %s4, %s692
      %p694 = scmp.lt.s32.totalorder %s29, 1
      %s695 = scalar_select %p694, %s29, 1
      %s696 = scalar_lea.vmem %s5, %s695
      %p697 = scmp.lt.s32.totalorder %s29, 1
      %s698 = scalar_select %p697, %s29, 1
      %s699 = smul.addr %s698, 4
      %s700 = smul.addr %s699, 4
      %s701 = scalar_lea.vmem %s6, %s700
      %p702 = scmp.lt.s32.totalorder %s29, 1
      %s703 = scalar_select %p702, %s29, 1
      %s704 = scalar_lea.vmem %s7, %s703
      %p705 = scmp.lt.s32.totalorder %s29, 1
      %s706 = scalar_select %p705, %s29, 1
      %s707 = scalar_lea.vmem %s8, %s706
      %p708 = scmp.lt.s32.totalorder %s29, 1
      %s709 = scalar_select %p708, %s29, 1
      %s710 = scalar_lea.vmem %s9, %s709
      %p711 = scmp.lt.s32.totalorder %s29, 1
      %s712 = scalar_select %p711, %s29, 1
      %s713 = smul.addr %s712, 4
      %s714 = smul.addr %s713, 4
      %s715 = scalar_lea.vmem %s10, %s714
      %p716 = scmp.lt.s32.totalorder %s29, 1
      %s717 = scalar_select %p716, %s29, 1
      %s718 = scalar_lea.vmem %s11, %s717
      %p719 = scmp.lt.s32.totalorder %s29, 1
      %s720 = scalar_select %p719, %s29, 1
      %s721 = smul.addr %s720, 8
      %s722 = smul.addr %s721, 4
      %s723 = scalar_lea.vmem %s12, %s722
      %p724 = scmp.lt.s32.totalorder %s29, 1
      %s725 = scalar_select %p724, %s29, 1
      %s726 = scalar_lea.vmem %s13, %s725
      %p727 = scmp.lt.s32.totalorder %s29, 1
      %s728 = scalar_select %p727, %s29, 1
      %s729 = scalar_lea.vmem %s14, %s728
      %p730 = scmp.lt.s32.totalorder %s29, 1
      %s731 = scalar_select %p730, %s29, 1
      %s732 = scalar_lea.vmem %s15, %s731
      %p734 = scmp.eq.s32.totalorder %s29, 0
      // Predicated region
      $region93: #{_lambda_.1} parent=91 // pred_check
        %p735 = pneg %p734
      $region94: #{_lambda_.1} parent=91 // pred_check_branch
        %737 = sbr.rel (%p735) target = $region96
      $region95: #{_lambda_.1} parent=91 // pred_region
        %v738 = vld [vmem:[%s0] sm:$0xff]
        %v739 = vld [vmem:[%s0 + $0x8] sm:$0xff]
        %v740 = vld [vmem:[%s2] sm:$0x1]
        %v741 = vld [vmem:[%s3] sm:$0x1]
        %vm742 = vcmask 261120
        %v743 = vsel %vm742, %v738, 0.0
        %744 = vadd.xlane.f32.xlu0 %v743
        %v745 = vpop.xlane.xlu0 %744
        %v746 = vsel %vm742, %v739, 0.0
        %747 = vadd.xlane.f32.xlu0 %v746
        %v748 = vpop.xlane.xlu0 %747
        %v749 = vrcp.pop 32.0
        %v750 = vmul.f32 %v745, %v749
        %v751 = vmul.f32 %v748, %v749
        %v752 = vsub.f32 %v738, %v750
        %v753 = vsub.f32 %v739, %v751
        %v754 = vmul.f32 %v752, %v752
        %v755 = vmul.f32 %v753, %v753
        %v756 = vsel %vm742, %v754, 0.0
        %757 = vadd.xlane.f32.xlu0 %v756
        %v758 = vpop.xlane.xlu0 %757
        %v759 = vsel %vm742, %v755, 0.0
        %760 = vadd.xlane.f32.xlu0 %v759
        %v761 = vpop.xlane.xlu0 %760
        %v762 = vmul.f32 %v758, %v749
        %v763 = vmul.f32 %v761, %v749
        %v764 = vadd.f32 %v762, 1e-12
        %v765 = vadd.f32 %v763, 1e-12
        %v766 = vrsqrt.pop %v764
        %v767 = vrsqrt.pop %v765
        %v768 = vmul.f32 %v752, %v766
        %v769 = vmul.f32 %v753, %v767
        %v771 = vlaneseq
        %v772 = vshrl.u32 %v771, 7
        %v773 = vsub.s32 0, %v772
        %v774 = vrot.slane %v740, %v773
        %v776 = vmul.f32 %v768, %v774
        %v777 = vmul.f32 %v769, %v774
        %v779 = vlaneseq
        %v780 = vshrl.u32 %v779, 7
        %v781 = vsub.s32 0, %v780
        %v782 = vrot.slane %v741, %v781
        %v784 = vadd.f32 %v776, %v782
        %v785 = vadd.f32 %v777, %v782
        %786 = vst.msk [vmem:[#allocation2] sm:$0xff] %vm742, %v784
        %787 = vst.msk [vmem:[#allocation2 + $0x8] sm:$0xff] %vm742, %v785
      $region96: #{_lambda_.1} parent=91 // pred_fallthru
        _
      %v788 = vld [vmem:[#allocation2] sm:$0xff]
      %v789 = vld [vmem:[#allocation2 + $0x8] sm:$0xff]
      %v790 = vld [vmem:[%s1] sm:$0x1]
      %v791 = vld [vmem:[%s1 + $0x1] sm:$0x1]
      %v792 = vpack.c.bf16 %v789, %v788
      %v793 = vld [vmem:[%s693] sm:$0xf]
      %v794 = vld [vmem:[%s693 + $0x4] sm:$0xf]
      %v795 = vld [vmem:[%s693 + $0x8] sm:$0xf]
      %v796 = vld [vmem:[%s693 + $0xc] sm:$0xf]
      %v797 = vld [vmem:[%s696] sm:$0x1]
      %v799 = vlaneseq
      %v800 = vshrl.u32 %v799, 7
      %v801 = vsub.s32 0, %v800
      %v802 = vrot.slane %v797, %v801
      %v808 = vunpack.c.l.b16 %v793
      %v809 = vunpack.c.l.b16 %v794
      %v810 = vunpack.c.l.b16 %v795
      %v811 = vunpack.c.l.b16 %v796
      %v812 = vpack.c.b16 %v809, %v808
      %v813 = vpack.c.b16 %v811, %v810
      %vm816 = vcmask 261120
      %v818 = vsel %vm816, %v792, 0
      %820 = vmatprep.subr.bf16.mxu0 0
      %821 = vmatpush1.bf16.msra.mxu0 %v812
      %822 = vmatprep.subr.bf16.mxu0 0
      %823 = vmatpush1.bf16.msra.mxu0 %v813
      %824 = vmatprep.subr.bf16.mxu0 0
      %825 = vmatpush1.bf16.msra.mxu0 0
      %826 = vmatprep.subr.bf16.mxu0 0
      %827 = vmatpush1.bf16.msra.mxu0 0
      %828 = vmatprep.subr.bf16.mxu0 0
      %829 = vmatpush1.bf16.msra.mxu0 0
      %830 = vmatprep.subr.bf16.mxu0 0
      %831 = vmatpush1.bf16.msra.mxu0 0
      %832 = vmatprep.subr.bf16.mxu0 0
      %833 = vmatpush1.bf16.msra.mxu0 0
      %834 = vmatprep.subr.bf16.mxu0 0
      %835 = vmatpush1.bf16.msra.mxu0 0
      %836 = vmatprep.subr.bf16.mxu0 0
      %837 = vmatpush1.bf16.msra.mxu0 0
      %838 = vmatprep.subr.bf16.mxu0 0
      %839 = vmatpush1.bf16.msra.mxu0 0
      %840 = vmatprep.subr.bf16.mxu0 0
      %841 = vmatpush1.bf16.msra.mxu0 0
      %842 = vmatprep.subr.bf16.mxu0 0
      %843 = vmatpush1.bf16.msra.mxu0 0
      %844 = vmatprep.subr.bf16.mxu0 0
      %845 = vmatpush1.bf16.msra.mxu0 0
      %846 = vmatprep.subr.bf16.mxu0 0
      %847 = vmatpush1.bf16.msra.mxu0 0
      %848 = vmatprep.subr.bf16.mxu0 0
      %849 = vmatpush1.bf16.msra.mxu0 0
      %850 = vmatprep.subr.bf16.mxu0 0
      %851 = vmatpush1.bf16.msra.mxu0 0
      %852 = vmatprep.mubr.bf16.mxu0 0
      %853 = vmatmul.mubr.bf16.gmra.mrb[0].mxu0 %v818
      %v854 = vpop.f32.mrb[0].mxu0
      %v855 = vadd.f32 %v802, %v854
      %v856 = vpop.f32.mrb[0].mxu0
      %v857 = vpop.f32.mrb[0].mxu0
      %v858 = vadd.f32 %v802, %v857
      %v859 = vpop.f32.mrb[0].mxu0
      %860 = vdwg.mxu0
      %v861 = vld [vmem:[%s701] sm:$0xf]
      %v862 = vld [vmem:[%s701 + $0x4] sm:$0xf]
      %v863 = vld [vmem:[%s701 + $0x8] sm:$0xf]
      %v864 = vld [vmem:[%s701 + $0xc] sm:$0xf]
      %v865 = vpack.c.bf16 %v855, %v855
      %v866 = vpack.c.bf16 %v858, %v858
      %868 = vrot.lane.b32.xlu0 %v865, 96
      %v869 = vpop.permute.xlu0 %868
      %vm870 = vcmask 64512
      %v872 = vsel %vm870, %v865, 0
      %v875 = vsel %vm870, %v869, 0
      %877 = vmatprep.subr.bf16.mxu0 0
      %878 = vmatpush1.bf16.xpose.msra.mxu0 %v875
      %879 = vmatprep.subr.bf16.mxu0 0
      %880 = vmatpush1.bf16.xpose.msra.mxu0 0
      %881 = vmatprep.subr.bf16.mxu0 0
      %882 = vmatpush1.bf16.xpose.msra.mxu0 0
      %883 = vmatprep.subr.bf16.mxu0 0
      %884 = vmatpush1.bf16.xpose.msra.mxu0 0
      %885 = vmatprep.subr.bf16.mxu0 0
      %886 = vmatpush1.bf16.xpose.msra.mxu0 0
      %887 = vmatprep.subr.bf16.mxu0 0
      %888 = vmatpush1.bf16.xpose.msra.mxu0 0
      %889 = vmatprep.subr.bf16.mxu0 0
      %890 = vmatpush1.bf16.xpose.msra.mxu0 0
      %891 = vmatprep.subr.bf16.mxu0 0
      %892 = vmatpush1.bf16.xpose.msra.mxu0 0
      %893 = vmatprep.subr.bf16.mxu0 0
      %894 = vmatpush1.bf16.xpose.msra.mxu0 0
      %895 = vmatprep.subr.bf16.mxu0 0
      %896 = vmatpush1.bf16.xpose.msra.mxu0 0
      %897 = vmatprep.subr.bf16.mxu0 0
      %898 = vmatpush1.bf16.xpose.msra.mxu0 0
      %899 = vmatprep.subr.bf16.mxu0 0
      %900 = vmatpush1.bf16.xpose.msra.mxu0 0
      %901 = vmatprep.subr.bf16.mxu0 0
      %902 = vmatpush1.bf16.xpose.msra.mxu0 0
      %903 = vmatprep.subr.bf16.mxu0 0
      %904 = vmatpush1.bf16.xpose.msra.mxu0 0
      %905 = vmatprep.subr.bf16.mxu0 0
      %906 = vmatpush1.bf16.xpose.msra.mxu0 0
      %907 = vmatprep.subr.bf16.mxu0 0
      %908 = vmatpush1.bf16.xpose.msra.mxu0 0
      %909 = vmatprep.mubr.bf16.mxu0 0
      %910 = vmatmul.mubr.bf16.gmra.mrb[0].mxu0 %v872
      %v911 = vpop.f32.mrb[0].mxu0
      %v912 = vadd.f32 0.0, %v911
      %v913 = vpop.f32.mrb[0].mxu0
      %v914 = vpop.f32.mrb[0].mxu0
      %v915 = vpop.f32.mrb[0].mxu0
      %916 = vdwg.mxu0
      %918 = vrot.lane.b32.xlu0 %v866, 96
      %v919 = vpop.permute.xlu0 %918
      %v921 = vsel %vm870, %v866, 0
      %v924 = vsel %vm870, %v919, 0
      %926 = vmatprep.subr.bf16.mxu0 0
      %927 = vmatpush1.bf16.xpose.msra.mxu0 %v924
      %928 = vmatprep.subr.bf16.mxu0 0
      %929 = vmatpush1.bf16.xpose.msra.mxu0 0
      %930 = vmatprep.subr.bf16.mxu0 0
      %931 = vmatpush1.bf16.xpose.msra.mxu0 0
      %932 = vmatprep.subr.bf16.mxu0 0
      %933 = vmatpush1.bf16.xpose.msra.mxu0 0
      %934 = vmatprep.subr.bf16.mxu0 0
      %935 = vmatpush1.bf16.xpose.msra.mxu0 0
      %936 = vmatprep.subr.bf16.mxu0 0
      %937 = vmatpush1.bf16.xpose.msra.mxu0 0
      %938 = vmatprep.subr.bf16.mxu0 0
      %939 = vmatpush1.bf16.xpose.msra.mxu0 0
      %940 = vmatprep.subr.bf16.mxu0 0
      %941 = vmatpush1.bf16.xpose.msra.mxu0 0
      %942 = vmatprep.subr.bf16.mxu0 0
      %943 = vmatpush1.bf16.xpose.msra.mxu0 0
      %944 = vmatprep.subr.bf16.mxu0 0
      %945 = vmatpush1.bf16.xpose.msra.mxu0 0
      %946 = vmatprep.subr.bf16.mxu0 0
      %947 = vmatpush1.bf16.xpose.msra.mxu0 0
      %948 = vmatprep.subr.bf16.mxu0 0
      %949 = vmatpush1.bf16.xpose.msra.mxu0 0
      %950 = vmatprep.subr.bf16.mxu0 0
      %951 = vmatpush1.bf16.xpose.msra.mxu0 0
      %952 = vmatprep.subr.bf16.mxu0 0
      %953 = vmatpush1.bf16.xpose.msra.mxu0 0
      %954 = vmatprep.subr.bf16.mxu0 0
      %955 = vmatpush1.bf16.xpose.msra.mxu0 0
      %956 = vmatprep.subr.bf16.mxu0 0
      %957 = vmatpush1.bf16.xpose.msra.mxu0 0
      %958 = vmatprep.mubr.bf16.mxu0 0
      %959 = vmatmul.mubr.bf16.gmra.mrb[0].mxu0 %v921
      %v960 = vpop.f32.mrb[0].mxu0
      %v961 = vadd.f32 0.0, %v960
      %v962 = vpop.f32.mrb[0].mxu0
      %v963 = vpop.f32.mrb[0].mxu0
      %v964 = vpop.f32.mrb[0].mxu0
      %965 = vdwg.mxu0
      %v966 = vmul.f32 %v912, 0.35355338
      %v967 = vmul.f32 %v961, 0.35355338
      %v970 = vlaneseq
      %v971 = vshrl.u32 %v970, 7
      %v972 = vsub.s32 0, %v971
      %v973 = vrot.slane %v790, %v972
      %v974 = vlaneseq
      %v975 = vshrl.u32 %v974, 7
      %v976 = vsub.s32 0, %v975
      %v977 = vrot.slane %v791, %v976
      %v980 = vadd.f32 %v966, %v973
      %v981 = vadd.f32 %v967, %v977
      %v982 = vsel %vm870, %v980, -inf
      %983 = vmax.xlane.f32.xlu0 %v982
      %v984 = vpop.xlane.xlu0 %983
      %v985 = vsel %vm870, %v981, -inf
      %986 = vmax.xlane.f32.xlu0 %v985
      %v987 = vpop.xlane.xlu0 %986
      %v988 = vsub.f32 %v980, %v984
      %v989 = vsub.f32 %v981, %v987
      %v990 = vmul.f32 %v988, 1.442695
      %v991 = vpow.pop %v990
      %v992 = vmul.f32 %v989, 1.442695
      %v993 = vpow.pop %v992
      %v994 = vsel %vm870, %v991, 0.0
      %995 = vadd.xlane.f32.xlu0 %v994
      %v996 = vpop.xlane.xlu0 %995
      %v997 = vsel %vm870, %v993, 0.0
      %998 = vadd.xlane.f32.xlu0 %v997
      %v999 = vpop.xlane.xlu0 %998
      %v1000 = vrcp.pop %v996
      %v1001 = vrcp.pop %v999
      %v1002 = vmul.f32 %v991, %v1000
      %v1003 = vmul.f32 %v993, %v1001
      %v1004 = vpack.c.bf16 %v1002, %v1002
      %v1005 = vpack.c.bf16 %v1003, %v1003
      %1006 = vrot.lane.b32.xlu0 %v865, 64
      %v1007 = vpop.permute.xlu0 %1006
      %v1009 = vsel %vm870, %v1004, 0
      %vm1011 = vcmask 1043456
      %v1013 = vsel %vm1011, %v1007, 0
      %1015 = vmatprep.subr.bf16.mxu0 0
      %1016 = vmatpush1.bf16.msra.mxu0 %v1013
      %1017 = vmatprep.subr.bf16.mxu0 0
      %1018 = vmatpush1.bf16.msra.mxu0 0
      %1019 = vmatprep.subr.bf16.mxu0 0
      %1020 = vmatpush1.bf16.msra.mxu0 0
      %1021 = vmatprep.subr.bf16.mxu0 0
      %1022 = vmatpush1.bf16.msra.mxu0 0
      %1023 = vmatprep.subr.bf16.mxu0 0
      %1024 = vmatpush1.bf16.msra.mxu0 0
      %1025 = vmatprep.subr.bf16.mxu0 0
      %1026 = vmatpush1.bf16.msra.mxu0 0
      %1027 = vmatprep.subr.bf16.mxu0 0
      %1028 = vmatpush1.bf16.msra.mxu0 0
      %1029 = vmatprep.subr.bf16.mxu0 0
      %1030 = vmatpush1.bf16.msra.mxu0 0
      %1031 = vmatprep.subr.bf16.mxu0 0
      %1032 = vmatpush1.bf16.msra.mxu0 0
      %1033 = vmatprep.subr.bf16.mxu0 0
      %1034 = vmatpush1.bf16.msra.mxu0 0
      %1035 = vmatprep.subr.bf16.mxu0 0
      %1036 = vmatpush1.bf16.msra.mxu0 0
      %1037 = vmatprep.subr.bf16.mxu0 0
      %1038 = vmatpush1.bf16.msra.mxu0 0
      %1039 = vmatprep.subr.bf16.mxu0 0
      %1040 = vmatpush1.bf16.msra.mxu0 0
      %1041 = vmatprep.subr.bf16.mxu0 0
      %1042 = vmatpush1.bf16.msra.mxu0 0
      %1043 = vmatprep.subr.bf16.mxu0 0
      %1044 = vmatpush1.bf16.msra.mxu0 0
      %1045 = vmatprep.subr.bf16.mxu0 0
      %1046 = vmatpush1.bf16.msra.mxu0 0
      %1047 = vmatprep.mubr.bf16.mxu0 0
      %1048 = vmatmul.mubr.bf16.gmra.mrb[0].mxu0 %v1009
      %v1049 = vpop.f32.mrb[0].mxu0
      %v1050 = vadd.f32 0.0, %v1049
      %v1051 = vpop.f32.mrb[0].mxu0
      %v1052 = vpop.f32.mrb[0].mxu0
      %v1053 = vpop.f32.mrb[0].mxu0
      %1054 = vdwg.mxu0
      %1055 = vrot.lane.b32.xlu0 %v866, 64
      %v1056 = vpop.permute.xlu0 %1055
      %v1058 = vsel %vm870, %v1005, 0
      %v1061 = vsel %vm1011, %v1056, 0
      %1063 = vmatprep.subr.bf16.mxu0 0
      %1064 = vmatpush1.bf16.msra.mxu0 %v1061
      %1065 = vmatprep.subr.bf16.mxu0 0
      %1066 = vmatpush1.bf16.msra.mxu0 0
      %1067 = vmatprep.subr.bf16.mxu0 0
      %1068 = vmatpush1.bf16.msra.mxu0 0
      %1069 = vmatprep.subr.bf16.mxu0 0
      %1070 = vmatpush1.bf16.msra.mxu0 0
      %1071 = vmatprep.subr.bf16.mxu0 0
      %1072 = vmatpush1.bf16.msra.mxu0 0
      %1073 = vmatprep.subr.bf16.mxu0 0
      %1074 = vmatpush1.bf16.msra.mxu0 0
      %1075 = vmatprep.subr.bf16.mxu0 0
      %1076 = vmatpush1.bf16.msra.mxu0 0
      %1077 = vmatprep.subr.bf16.mxu0 0
      %1078 = vmatpush1.bf16.msra.mxu0 0
      %1079 = vmatprep.subr.bf16.mxu0 0
      %1080 = vmatpush1.bf16.msra.mxu0 0
      %1081 = vmatprep.subr.bf16.mxu0 0
      %1082 = vmatpush1.bf16.msra.mxu0 0
      %1083 = vmatprep.subr.bf16.mxu0 0
      %1084 = vmatpush1.bf16.msra.mxu0 0
      %1085 = vmatprep.subr.bf16.mxu0 0
      %1086 = vmatpush1.bf16.msra.mxu0 0
      %1087 = vmatprep.subr.bf16.mxu0 0
      %1088 = vmatpush1.bf16.msra.mxu0 0
      %1089 = vmatprep.subr.bf16.mxu0 0
      %1090 = vmatpush1.bf16.msra.mxu0 0
      %1091 = vmatprep.subr.bf16.mxu0 0
      %1092 = vmatpush1.bf16.msra.mxu0 0
      %1093 = vmatprep.subr.bf16.mxu0 0
      %1094 = vmatpush1.bf16.msra.mxu0 0
      %1095 = vmatprep.mubr.bf16.mxu0 0
      %1096 = vmatmul.mubr.bf16.gmra.mrb[0].mxu0 %v1058
      %v1097 = vpop.f32.mrb[0].mxu0
      %v1098 = vadd.f32 0.0, %v1097
      %v1099 = vpop.f32.mrb[0].mxu0
      %v1100 = vpop.f32.mrb[0].mxu0
      %v1101 = vpop.f32.mrb[0].mxu0
      %1102 = vdwg.mxu0
      %v1103 = vpack.c.bf16 %v1098, %v1050
      %1104 = vrot.lane.b32.xlu0 %v865, 120
      %v1105 = vpop.permute.xlu0 %1104
      %1106 = vrot.lane.b32.xlu0 %v865, 88
      %v1107 = vpop.permute.xlu0 %1106
      %v1109 = vsel %vm870, %v1105, 0
      %v1112 = vsel %vm870, %v1107, 0
      %1114 = vmatprep.subr.bf16.mxu0 0
      %1115 = vmatpush1.bf16.xpose.msra.mxu0 %v1112
      %1116 = vmatprep.subr.bf16.mxu0 0
      %1117 = vmatpush1.bf16.xpose.msra.mxu0 0
      %1118 = vmatprep.subr.bf16.mxu0 0
      %1119 = vmatpush1.bf16.xpose.msra.mxu0 0
      %1120 = vmatprep.subr.bf16.mxu0 0
      %1121 = vmatpush1.bf16.xpose.msra.mxu0 0
      %1122 = vmatprep.subr.bf16.mxu0 0
      %1123 = vmatpush1.bf16.xpose.msra.mxu0 0
      %1124 = vmatprep.subr.bf16.mxu0 0
      %1125 = vmatpush1.bf16.xpose.msra.mxu0 0
      %1126 = vmatprep.subr.bf16.mxu0 0
      %1127 = vmatpush1.bf16.xpose.msra.mxu0 0
      %1128 = vmatprep.subr.bf16.mxu0 0
      %1129 = vmatpush1.bf16.xpose.msra.mxu0 0
      %1130 = vmatprep.subr.bf16.mxu0 0
      %1131 = vmatpush1.bf16.xpose.msra.mxu0 0
      %1132 = vmatprep.subr.bf16.mxu0 0
      %1133 = vmatpush1.bf16.xpose.msra.mxu0 0
      %1134 = vmatprep.subr.bf16.mxu0 0
      %1135 = vmatpush1.bf16.xpose.msra.mxu0 0
      %1136 = vmatprep.subr.bf16.mxu0 0
      %1137 = vmatpush1.bf16.xpose.msra.mxu0 0
      %1138 = vmatprep.subr.bf16.mxu0 0
      %1139 = vmatpush1.bf16.xpose.msra.mxu0 0
      %1140 = vmatprep.subr.bf16.mxu0 0
      %1141 = vmatpush1.bf16.xpose.msra.mxu0 0
      %1142 = vmatprep.subr.bf16.mxu0 0
      %1143 = vmatpush1.bf16.xpose.msra.mxu0 0
      %1144 = vmatprep.subr.bf16.mxu0 0
      %1145 = vmatpush1.bf16.xpose.msra.mxu0 0
      %1146 = vmatprep.mubr.bf16.mxu0 0
      %1147 = vmatmul.mubr.bf16.gmra.mrb[0].mxu0 %v1109
      %v1148 = vpop.f32.mrb[0].mxu0
      %v1149 = vadd.f32 0.0, %v1148
      %v1150 = vpop.f32.mrb[0].mxu0
      %v1151 = vpop.f32.mrb[0].mxu0
      %v1152 = vpop.f32.mrb[0].mxu0
      %1153 = vdwg.mxu0
      %1154 = vrot.lane.b32.xlu0 %v866, 120
      %v1155 = vpop.permute.xlu0 %1154
      %1156 = vrot.lane.b32.xlu0 %v866, 88
      %v1157 = vpop.permute.xlu0 %1156
      %v1159 = vsel %vm870, %v1155, 0
      %v1162 = vsel %vm870, %v1157, 0
      %1164 = vmatprep.subr.bf16.mxu0 0
      %1165 = vmatpush1.bf16.xpose.msra.mxu0 %v1162
      %1166 = vmatprep.subr.bf16.mxu0 0
      %1167 = vmatpush1.bf16.xpose.msra.mxu0 0
      %1168 = vmatprep.subr.bf16.mxu0 0
      %1169 = vmatpush1.bf16.xpose.msra.mxu0 0
      %1170 = vmatprep.subr.bf16.mxu0 0
      %1171 = vmatpush1.bf16.xpose.msra.mxu0 0
      %1172 = vmatprep.subr.bf16.mxu0 0
      %1173 = vmatpush1.bf16.xpose.msra.mxu0 0
      %1174 = vmatprep.subr.bf16.mxu0 0
      %1175 = vmatpush1.bf16.xpose.msra.mxu0 0
      %1176 = vmatprep.subr.bf16.mxu0 0
      %1177 = vmatpush1.bf16.xpose.msra.mxu0 0
      %1178 = vmatprep.subr.bf16.mxu0 0
      %1179 = vmatpush1.bf16.xpose.msra.mxu0 0
      %1180 = vmatprep.subr.bf16.mxu0 0
      %1181 = vmatpush1.bf16.xpose.msra.mxu0 0
      %1182 = vmatprep.subr.bf16.mxu0 0
      %1183 = vmatpush1.bf16.xpose.msra.mxu0 0
      %1184 = vmatprep.subr.bf16.mxu0 0
      %1185 = vmatpush1.bf16.xpose.msra.mxu0 0
      %1186 = vmatprep.subr.bf16.mxu0 0
      %1187 = vmatpush1.bf16.xpose.msra.mxu0 0
      %1188 = vmatprep.subr.bf16.mxu0 0
      %1189 = vmatpush1.bf16.xpose.msra.mxu0 0
      %1190 = vmatprep.subr.bf16.mxu0 0
      %1191 = vmatpush1.bf16.xpose.msra.mxu0 0
      %1192 = vmatprep.subr.bf16.mxu0 0
      %1193 = vmatpush1.bf16.xpose.msra.mxu0 0
      %1194 = vmatprep.subr.bf16.mxu0 0
      %1195 = vmatpush1.bf16.xpose.msra.mxu0 0
      %1196 = vmatprep.mubr.bf16.mxu0 0
      %1197 = vmatmul.mubr.bf16.gmra.mrb[0].mxu0 %v1159
      %v1198 = vpop.f32.mrb[0].mxu0
      %v1199 = vadd.f32 0.0, %v1198
      %v1200 = vpop.f32.mrb[0].mxu0
      %v1201 = vpop.f32.mrb[0].mxu0
      %v1202 = vpop.f32.mrb[0].mxu0
      %1203 = vdwg.mxu0
      %v1204 = vmul.f32 %v1149, 0.35355338
      %v1205 = vmul.f32 %v1199, 0.35355338
      %v1206 = vadd.f32 %v1204, %v973
      %v1207 = vadd.f32 %v1205, %v977
      %v1208 = vsel %vm870, %v1206, -inf
      %1209 = vmax.xlane.f32.xlu0 %v1208
      %v1210 = vpop.xlane.xlu0 %1209
      %v1211 = vsel %vm870, %v1207, -inf
      %1212 = vmax.xlane.f32.xlu0 %v1211
      %v1213 = vpop.xlane.xlu0 %1212
      %v1214 = vsub.f32 %v1206, %v1210
      %v1215 = vsub.f32 %v1207, %v1213
      %v1216 = vmul.f32 %v1214, 1.442695
      %v1217 = vpow.pop %v1216
      %v1218 = vmul.f32 %v1215, 1.442695
      %v1219 = vpow.pop %v1218
      %v1220 = vsel %vm870, %v1217, 0.0
      %1221 = vadd.xlane.f32.xlu0 %v1220
      %v1222 = vpop.xlane.xlu0 %1221
      %v1223 = vsel %vm870, %v1219, 0.0
      %1224 = vadd.xlane.f32.xlu0 %v1223
      %v1225 = vpop.xlane.xlu0 %1224
      %v1226 = vrcp.pop %v1222
      %v1227 = vrcp.pop %v1225
      %v1228 = vmul.f32 %v1217, %v1226
      %v1229 = vmul.f32 %v1219, %v1227
      %v1230 = vpack.c.bf16 %v1228, %v1228
      %v1231 = vpack.c.bf16 %v1229, %v1229
      %1232 = vrot.lane.b32.xlu0 %v865, 56
      %v1233 = vpop.permute.xlu0 %1232
      %v1235 = vsel %vm870, %v1230, 0
      %v1238 = vsel %vm1011, %v1233, 0
      %1240 = vmatprep.subr.bf16.mxu0 0
      %1241 = vmatpush1.bf16.msra.mxu0 %v1238
      %1242 = vmatprep.subr.bf16.mxu0 0
      %1243 = vmatpush1.bf16.msra.mxu0 0
      %1244 = vmatprep.subr.bf16.mxu0 0
      %1245 = vmatpush1.bf16.msra.mxu0 0
      %1246 = vmatprep.subr.bf16.mxu0 0
      %1247 = vmatpush1.bf16.msra.mxu0 0
      %1248 = vmatprep.subr.bf16.mxu0 0
      %1249 = vmatpush1.bf16.msra.mxu0 0
      %1250 = vmatprep.subr.bf16.mxu0 0
      %1251 = vmatpush1.bf16.msra.mxu0 0
      %1252 = vmatprep.subr.bf16.mxu0 0
      %1253 = vmatpush1.bf16.msra.mxu0 0
      %1254 = vmatprep.subr.bf16.mxu0 0
      %1255 = vmatpush1.bf16.msra.mxu0 0
      %1256 = vmatprep.subr.bf16.mxu0 0
      %1257 = vmatpush1.bf16.msra.mxu0 0
      %1258 = vmatprep.subr.bf16.mxu0 0
      %1259 = vmatpush1.bf16.msra.mxu0 0
      %1260 = vmatprep.subr.bf16.mxu0 0
      %1261 = vmatpush1.bf16.msra.mxu0 0
      %1262 = vmatprep.subr.bf16.mxu0 0
      %1263 = vmatpush1.bf16.msra.mxu0 0
      %1264 = vmatprep.subr.bf16.mxu0 0
      %1265 = vmatpush1.bf16.msra.mxu0 0
      %1266 = vmatprep.subr.bf16.mxu0 0
      %1267 = vmatpush1.bf16.msra.mxu0 0
      %1268 = vmatprep.subr.bf16.mxu0 0
      %1269 = vmatpush1.bf16.msra.mxu0 0
      %1270 = vmatprep.subr.bf16.mxu0 0
      %1271 = vmatpush1.bf16.msra.mxu0 0
      %1272 = vmatprep.mubr.bf16.mxu0 0
      %1273 = vmatmul.mubr.bf16.gmra.mrb[0].mxu0 %v1235
      %v1274 = vpop.f32.mrb[0].mxu0
      %v1275 = vadd.f32 0.0, %v1274
      %v1276 = vpop.f32.mrb[0].mxu0
      %v1277 = vpop.f32.mrb[0].mxu0
      %v1278 = vpop.f32.mrb[0].mxu0
      %1279 = vdwg.mxu0
      %1280 = vrot.lane.b32.xlu0 %v866, 56
      %v1281 = vpop.permute.xlu0 %1280
      %v1283 = vsel %vm870, %v1231, 0
      %v1286 = vsel %vm1011, %v1281, 0
      %1288 = vmatprep.subr.bf16.mxu0 0
      %1289 = vmatpush1.bf16.msra.mxu0 %v1286
      %1290 = vmatprep.subr.bf16.mxu0 0
      %1291 = vmatpush1.bf16.msra.mxu0 0
      %1292 = vmatprep.subr.bf16.mxu0 0
      %1293 = vmatpush1.bf16.msra.mxu0 0
      %1294 = vmatprep.subr.bf16.mxu0 0
      %1295 = vmatpush1.bf16.msra.mxu0 0
      %1296 = vmatprep.subr.bf16.mxu0 0
      %1297 = vmatpush1.bf16.msra.mxu0 0
      %1298 = vmatprep.subr.bf16.mxu0 0
      %1299 = vmatpush1.bf16.msra.mxu0 0
      %1300 = vmatprep.subr.bf16.mxu0 0
      %1301 = vmatpush1.bf16.msra.mxu0 0
      %1302 = vmatprep.subr.bf16.mxu0 0
      %1303 = vmatpush1.bf16.msra.mxu0 0
      %1304 = vmatprep.subr.bf16.mxu0 0
      %1305 = vmatpush1.bf16.msra.mxu0 0
      %1306 = vmatprep.subr.bf16.mxu0 0
      %1307 = vmatpush1.bf16.msra.mxu0 0
      %1308 = vmatprep.subr.bf16.mxu0 0
      %1309 = vmatpush1.bf16.msra.mxu0 0
      %1310 = vmatprep.subr.bf16.mxu0 0
      %1311 = vmatpush1.bf16.msra.mxu0 0
      %1312 = vmatprep.subr.bf16.mxu0 0
      %1313 = vmatpush1.bf16.msra.mxu0 0
      %1314 = vmatprep.subr.bf16.mxu0 0
      %1315 = vmatpush1.bf16.msra.mxu0 0
      %1316 = vmatprep.subr.bf16.mxu0 0
      %1317 = vmatpush1.bf16.msra.mxu0 0
      %1318 = vmatprep.subr.bf16.mxu0 0
      %1319 = vmatpush1.bf16.msra.mxu0 0
      %1320 = vmatprep.mubr.bf16.mxu0 0
      %1321 = vmatmul.mubr.bf16.gmra.mrb[0].mxu0 %v1283
      %v1322 = vpop.f32.mrb[0].mxu0
      %v1323 = vadd.f32 0.0, %v1322
      %v1324 = vpop.f32.mrb[0].mxu0
      %v1325 = vpop.f32.mrb[0].mxu0
      %v1326 = vpop.f32.mrb[0].mxu0
      %1327 = vdwg.mxu0
      %v1328 = vpack.c.bf16 %v1323, %v1275
      %v1330 = vsel %vm870, %v1328, 0
      %v1333 = vsel %vm1011, %v862, 0
      %1335 = vmatprep.subr.bf16.mxu0 0
      %1336 = vmatpush1.bf16.msra.mxu0 %v1333
      %1337 = vmatprep.subr.bf16.mxu0 0
      %1338 = vmatpush1.bf16.msra.mxu0 0
      %1339 = vmatprep.subr.bf16.mxu0 0
      %1340 = vmatpush1.bf16.msra.mxu0 0
      %1341 = vmatprep.subr.bf16.mxu0 0
      %1342 = vmatpush1.bf16.msra.mxu0 0
      %1343 = vmatprep.subr.bf16.mxu0 0
      %1344 = vmatpush1.bf16.msra.mxu0 0
      %1345 = vmatprep.subr.bf16.mxu0 0
      %1346 = vmatpush1.bf16.msra.mxu0 0
      %1347 = vmatprep.subr.bf16.mxu0 0
      %1348 = vmatpush1.bf16.msra.mxu0 0
      %1349 = vmatprep.subr.bf16.mxu0 0
      %1350 = vmatpush1.bf16.msra.mxu0 0
      %1351 = vmatprep.subr.bf16.mxu0 0
      %1352 = vmatpush1.bf16.msra.mxu0 0
      %1353 = vmatprep.subr.bf16.mxu0 0
      %1354 = vmatpush1.bf16.msra.mxu0 0
      %1355 = vmatprep.subr.bf16.mxu0 0
      %1356 = vmatpush1.bf16.msra.mxu0 0
      %1357 = vmatprep.subr.bf16.mxu0 0
      %1358 = vmatpush1.bf16.msra.mxu0 0
      %1359 = vmatprep.subr.bf16.mxu0 0
      %1360 = vmatpush1.bf16.msra.mxu0 0
      %1361 = vmatprep.subr.bf16.mxu0 0
      %1362 = vmatpush1.bf16.msra.mxu0 0
      %1363 = vmatprep.subr.bf16.mxu0 0
      %1364 = vmatpush1.bf16.msra.mxu0 0
      %1365 = vmatprep.subr.bf16.mxu0 0
      %1366 = vmatpush1.bf16.msra.mxu0 0
      %1367 = vmatprep.mubr.bf16.mxu0 0
      %1368 = vmatmul.mubr.bf16.gmra.mrb[0].mxu0 %v1330
      %v1369 = vpop.f32.mrb[0].mxu0
      %v1370 = vadd.f32 0.0, %v1369
      %v1371 = vpop.f32.mrb[0].mxu0
      %v1372 = vpop.f32.mrb[0].mxu0
      %v1373 = vadd.f32 0.0, %v1372
      %v1374 = vpop.f32.mrb[0].mxu0
      %1375 = vdwg.mxu0
      %v1377 = vsel %vm870, %v1103, 0
      %v1380 = vsel %vm1011, %v861, 0
      %1382 = vmatprep.subr.bf16.mxu0 0
      %1383 = vmatpush1.bf16.msra.mxu0 %v1380
      %1384 = vmatprep.subr.bf16.mxu0 0
      %1385 = vmatpush1.bf16.msra.mxu0 0
      %1386 = vmatprep.subr.bf16.mxu0 0
      %1387 = vmatpush1.bf16.msra.mxu0 0
      %1388 = vmatprep.subr.bf16.mxu0 0
      %1389 = vmatpush1.bf16.msra.mxu0 0
      %1390 = vmatprep.subr.bf16.mxu0 0
      %1391 = vmatpush1.bf16.msra.mxu0 0
      %1392 = vmatprep.subr.bf16.mxu0 0
      %1393 = vmatpush1.bf16.msra.mxu0 0
      %1394 = vmatprep.subr.bf16.mxu0 0
      %1395 = vmatpush1.bf16.msra.mxu0 0
      %1396 = vmatprep.subr.bf16.mxu0 0
      %1397 = vmatpush1.bf16.msra.mxu0 0
      %1398 = vmatprep.subr.bf16.mxu0 0
      %1399 = vmatpush1.bf16.msra.mxu0 0
      %1400 = vmatprep.subr.bf16.mxu0 0
      %1401 = vmatpush1.bf16.msra.mxu0 0
      %1402 = vmatprep.subr.bf16.mxu0 0
      %1403 = vmatpush1.bf16.msra.mxu0 0
      %1404 = vmatprep.subr.bf16.mxu0 0
      %1405 = vmatpush1.bf16.msra.mxu0 0
      %1406 = vmatprep.subr.bf16.mxu0 0
      %1407 = vmatpush1.bf16.msra.mxu0 0
      %1408 = vmatprep.subr.bf16.mxu0 0
      %1409 = vmatpush1.bf16.msra.mxu0 0
      %1410 = vmatprep.subr.bf16.mxu0 0
      %1411 = vmatpush1.bf16.msra.mxu0 0
      %1412 = vmatprep.subr.bf16.mxu0 0
      %1413 = vmatpush1.bf16.msra.mxu0 0
      %1414 = vmatprep.mubr.bf16.mxu0 0
      %1415 = vmatmul.mubr.bf16.gmra.mrb[0].mxu0 %v1377
      %v1416 = vpop.f32.mrb[0].mxu0
      %v1417 = vadd.f32 %v1370, %v1416
      %v1418 = vpop.f32.mrb[0].mxu0
      %v1419 = vpop.f32.mrb[0].mxu0
      %v1420 = vadd.f32 %v1373, %v1419
      %v1421 = vpop.f32.mrb[0].mxu0
      %1422 = vdwg.mxu0
      %1423 = vrot.lane.b32.xlu0 %v865, 112
      %v1424 = vpop.permute.xlu0 %1423
      %1425 = vrot.lane.b32.xlu0 %v865, 80
      %v1426 = vpop.permute.xlu0 %1425
      %v1428 = vsel %vm870, %v1424, 0
      %v1431 = vsel %vm870, %v1426, 0
      %1433 = vmatprep.subr.bf16.mxu0 0
      %1434 = vmatpush1.bf16.xpose.msra.mxu0 %v1431
      %1435 = vmatprep.subr.bf16.mxu0 0
      %1436 = vmatpush1.bf16.xpose.msra.mxu0 0
      %1437 = vmatprep.subr.bf16.mxu0 0
      %1438 = vmatpush1.bf16.xpose.msra.mxu0 0
      %1439 = vmatprep.subr.bf16.mxu0 0
      %1440 = vmatpush1.bf16.xpose.msra.mxu0 0
      %1441 = vmatprep.subr.bf16.mxu0 0
      %1442 = vmatpush1.bf16.xpose.msra.mxu0 0
      %1443 = vmatprep.subr.bf16.mxu0 0
      %1444 = vmatpush1.bf16.xpose.msra.mxu0 0
      %1445 = vmatprep.subr.bf16.mxu0 0
      %1446 = vmatpush1.bf16.xpose.msra.mxu0 0
      %1447 = vmatprep.subr.bf16.mxu0 0
      %1448 = vmatpush1.bf16.xpose.msra.mxu0 0
      %1449 = vmatprep.subr.bf16.mxu0 0
      %1450 = vmatpush1.bf16.xpose.msra.mxu0 0
      %1451 = vmatprep.subr.bf16.mxu0 0
      %1452 = vmatpush1.bf16.xpose.msra.mxu0 0
      %1453 = vmatprep.subr.bf16.mxu0 0
      %1454 = vmatpush1.bf16.xpose.msra.mxu0 0
      %1455 = vmatprep.subr.bf16.mxu0 0
      %1456 = vmatpush1.bf16.xpose.msra.mxu0 0
      %1457 = vmatprep.subr.bf16.mxu0 0
      %1458 = vmatpush1.bf16.xpose.msra.mxu0 0
      %1459 = vmatprep.subr.bf16.mxu0 0
      %1460 = vmatpush1.bf16.xpose.msra.mxu0 0
      %1461 = vmatprep.subr.bf16.mxu0 0
      %1462 = vmatpush1.bf16.xpose.msra.mxu0 0
      %1463 = vmatprep.subr.bf16.mxu0 0
      %1464 = vmatpush1.bf16.xpose.msra.mxu0 0
      %1465 = vmatprep.mubr.bf16.mxu0 0
      %1466 = vmatmul.mubr.bf16.gmra.mrb[0].mxu0 %v1428
      %v1467 = vpop.f32.mrb[0].mxu0
      %v1468 = vadd.f32 0.0, %v1467
      %v1469 = vpop.f32.mrb[0].mxu0
      %v1470 = vpop.f32.mrb[0].mxu0
      %v1471 = vpop.f32.mrb[0].mxu0
      %1472 = vdwg.mxu0
      %1473 = vrot.lane.b32.xlu0 %v866, 112
      %v1474 = vpop.permute.xlu0 %1473
      %1475 = vrot.lane.b32.xlu0 %v866, 80
      %v1476 = vpop.permute.xlu0 %1475
      %v1478 = vsel %vm870, %v1474, 0
      %v1481 = vsel %vm870, %v1476, 0
      %1483 = vmatprep.subr.bf16.mxu0 0
      %1484 = vmatpush1.bf16.xpose.msra.mxu0 %v1481
      %1485 = vmatprep.subr.bf16.mxu0 0
      %1486 = vmatpush1.bf16.xpose.msra.mxu0 0
      %1487 = vmatprep.subr.bf16.mxu0 0
      %1488 = vmatpush1.bf16.xpose.msra.mxu0 0
      %1489 = vmatprep.subr.bf16.mxu0 0
      %1490 = vmatpush1.bf16.xpose.msra.mxu0 0
      %1491 = vmatprep.subr.bf16.mxu0 0
      %1492 = vmatpush1.bf16.xpose.msra.mxu0 0
      %1493 = vmatprep.subr.bf16.mxu0 0
      %1494 = vmatpush1.bf16.xpose.msra.mxu0 0
      %1495 = vmatprep.subr.bf16.mxu0 0
      %1496 = vmatpush1.bf16.xpose.msra.mxu0 0
      %1497 = vmatprep.subr.bf16.mxu0 0
      %1498 = vmatpush1.bf16.xpose.msra.mxu0 0
      %1499 = vmatprep.subr.bf16.mxu0 0
      %1500 = vmatpush1.bf16.xpose.msra.mxu0 0
      %1501 = vmatprep.subr.bf16.mxu0 0
      %1502 = vmatpush1.bf16.xpose.msra.mxu0 0
      %1503 = vmatprep.subr.bf16.mxu0 0
      %1504 = vmatpush1.bf16.xpose.msra.mxu0 0
      %1505 = vmatprep.subr.bf16.mxu0 0
      %1506 = vmatpush1.bf16.xpose.msra.mxu0 0
      %1507 = vmatprep.subr.bf16.mxu0 0
      %1508 = vmatpush1.bf16.xpose.msra.mxu0 0
      %1509 = vmatprep.subr.bf16.mxu0 0
      %1510 = vmatpush1.bf16.xpose.msra.mxu0 0
      %1511 = vmatprep.subr.bf16.mxu0 0
      %1512 = vmatpush1.bf16.xpose.msra.mxu0 0
      %1513 = vmatprep.subr.bf16.mxu0 0
      %1514 = vmatpush1.bf16.xpose.msra.mxu0 0
      %1515 = vmatprep.mubr.bf16.mxu0 0
      %1516 = vmatmul.mubr.bf16.gmra.mrb[0].mxu0 %v1478
      %v1517 = vpop.f32.mrb[0].mxu0
      %v1518 = vadd.f32 0.0, %v1517
      %v1519 = vpop.f32.mrb[0].mxu0
      %v1520 = vpop.f32.mrb[0].mxu0
      %v1521 = vpop.f32.mrb[0].mxu0
      %1522 = vdwg.mxu0
      %v1523 = vmul.f32 %v1468, 0.35355338
      %v1524 = vmul.f32 %v1518, 0.35355338
      %v1525 = vadd.f32 %v1523, %v973
      %v1526 = vadd.f32 %v1524, %v977
      %v1527 = vsel %vm870, %v1525, -inf
      %1528 = vmax.xlane.f32.xlu0 %v1527
      %v1529 = vpop.xlane.xlu0 %1528
      %v1530 = vsel %vm870, %v1526, -inf
      %1531 = vmax.xlane.f32.xlu0 %v1530
      %v1532 = vpop.xlane.xlu0 %1531
      %v1533 = vsub.f32 %v1525, %v1529
      %v1534 = vsub.f32 %v1526, %v1532
      %v1535 = vmul.f32 %v1533, 1.442695
      %v1536 = vpow.pop %v1535
      %v1537 = vmul.f32 %v1534, 1.442695
      %v1538 = vpow.pop %v1537
      %v1539 = vsel %vm870, %v1536, 0.0
      %1540 = vadd.xlane.f32.xlu0 %v1539
      %v1541 = vpop.xlane.xlu0 %1540
      %v1542 = vsel %vm870, %v1538, 0.0
      %1543 = vadd.xlane.f32.xlu0 %v1542
      %v1544 = vpop.xlane.xlu0 %1543
      %v1545 = vrcp.pop %v1541
      %v1546 = vrcp.pop %v1544
      %v1547 = vmul.f32 %v1536, %v1545
      %v1548 = vmul.f32 %v1538, %v1546
      %v1549 = vpack.c.bf16 %v1547, %v1547
      %v1550 = vpack.c.bf16 %v1548, %v1548
      %1551 = vrot.lane.b32.xlu0 %v865, 48
      %v1552 = vpop.permute.xlu0 %1551
      %v1554 = vsel %vm870, %v1549, 0
      %v1557 = vsel %vm1011, %v1552, 0
      %1559 = vmatprep.subr.bf16.mxu0 0
      %1560 = vmatpush1.bf16.msra.mxu0 %v1557
      %1561 = vmatprep.subr.bf16.mxu0 0
      %1562 = vmatpush1.bf16.msra.mxu0 0
      %1563 = vmatprep.subr.bf16.mxu0 0
      %1564 = vmatpush1.bf16.msra.mxu0 0
      %1565 = vmatprep.subr.bf16.mxu0 0
      %1566 = vmatpush1.bf16.msra.mxu0 0
      %1567 = vmatprep.subr.bf16.mxu0 0
      %1568 = vmatpush1.bf16.msra.mxu0 0
      %1569 = vmatprep.subr.bf16.mxu0 0
      %1570 = vmatpush1.bf16.msra.mxu0 0
      %1571 = vmatprep.subr.bf16.mxu0 0
      %1572 = vmatpush1.bf16.msra.mxu0 0
      %1573 = vmatprep.subr.bf16.mxu0 0
      %1574 = vmatpush1.bf16.msra.mxu0 0
      %1575 = vmatprep.subr.bf16.mxu0 0
      %1576 = vmatpush1.bf16.msra.mxu0 0
      %1577 = vmatprep.subr.bf16.mxu0 0
      %1578 = vmatpush1.bf16.msra.mxu0 0
      %1579 = vmatprep.subr.bf16.mxu0 0
      %1580 = vmatpush1.bf16.msra.mxu0 0
      %1581 = vmatprep.subr.bf16.mxu0 0
      %1582 = vmatpush1.bf16.msra.mxu0 0
      %1583 = vmatprep.subr.bf16.mxu0 0
      %1584 = vmatpush1.bf16.msra.mxu0 0
      %1585 = vmatprep.subr.bf16.mxu0 0
      %1586 = vmatpush1.bf16.msra.mxu0 0
      %1587 = vmatprep.subr.bf16.mxu0 0
      %1588 = vmatpush1.bf16.msra.mxu0 0
      %1589 = vmatprep.subr.bf16.mxu0 0
      %1590 = vmatpush1.bf16.msra.mxu0 0
      %1591 = vmatprep.mubr.bf16.mxu0 0
      %1592 = vmatmul.mubr.bf16.gmra.mrb[0].mxu0 %v1554
      %v1593 = vpop.f32.mrb[0].mxu0
      %v1594 = vadd.f32 0.0, %v1593
      %v1595 = vpop.f32.mrb[0].mxu0
      %v1596 = vpop.f32.mrb[0].mxu0
      %v1597 = vpop.f32.mrb[0].mxu0
      %1598 = vdwg.mxu0
      %1599 = vrot.lane.b32.xlu0 %v866, 48
      %v1600 = vpop.permute.xlu0 %1599
      %v1602 = vsel %vm870, %v1550, 0
      %v1605 = vsel %vm1011, %v1600, 0
      %1607 = vmatprep.subr.bf16.mxu0 0
      %1608 = vmatpush1.bf16.msra.mxu0 %v1605
      %1609 = vmatprep.subr.bf16.mxu0 0
      %1610 = vmatpush1.bf16.msra.mxu0 0
      %1611 = vmatprep.subr.bf16.mxu0 0
      %1612 = vmatpush1.bf16.msra.mxu0 0
      %1613 = vmatprep.subr.bf16.mxu0 0
      %1614 = vmatpush1.bf16.msra.mxu0 0
      %1615 = vmatprep.subr.bf16.mxu0 0
      %1616 = vmatpush1.bf16.msra.mxu0 0
      %1617 = vmatprep.subr.bf16.mxu0 0
      %1618 = vmatpush1.bf16.msra.mxu0 0
      %1619 = vmatprep.subr.bf16.mxu0 0
      %1620 = vmatpush1.bf16.msra.mxu0 0
      %1621 = vmatprep.subr.bf16.mxu0 0
      %1622 = vmatpush1.bf16.msra.mxu0 0
      %1623 = vmatprep.subr.bf16.mxu0 0
      %1624 = vmatpush1.bf16.msra.mxu0 0
      %1625 = vmatprep.subr.bf16.mxu0 0
      %1626 = vmatpush1.bf16.msra.mxu0 0
      %1627 = vmatprep.subr.bf16.mxu0 0
      %1628 = vmatpush1.bf16.msra.mxu0 0
      %1629 = vmatprep.subr.bf16.mxu0 0
      %1630 = vmatpush1.bf16.msra.mxu0 0
      %1631 = vmatprep.subr.bf16.mxu0 0
      %1632 = vmatpush1.bf16.msra.mxu0 0
      %1633 = vmatprep.subr.bf16.mxu0 0
      %1634 = vmatpush1.bf16.msra.mxu0 0
      %1635 = vmatprep.subr.bf16.mxu0 0
      %1636 = vmatpush1.bf16.msra.mxu0 0
      %1637 = vmatprep.subr.bf16.mxu0 0
      %1638 = vmatpush1.bf16.msra.mxu0 0
      %1639 = vmatprep.mubr.bf16.mxu0 0
      %1640 = vmatmul.mubr.bf16.gmra.mrb[0].mxu0 %v1602
      %v1641 = vpop.f32.mrb[0].mxu0
      %v1642 = vadd.f32 0.0, %v1641
      %v1643 = vpop.f32.mrb[0].mxu0
      %v1644 = vpop.f32.mrb[0].mxu0
      %v1645 = vpop.f32.mrb[0].mxu0
      %1646 = vdwg.mxu0
      %v1647 = vpack.c.bf16 %v1642, %v1594
      %v1649 = vsel %vm870, %v1647, 0
      %v1652 = vsel %vm1011, %v863, 0
      %1654 = vmatprep.subr.bf16.mxu0 0
      %1655 = vmatpush1.bf16.msra.mxu0 %v1652
      %1656 = vmatprep.subr.bf16.mxu0 0
      %1657 = vmatpush1.bf16.msra.mxu0 0
      %1658 = vmatprep.subr.bf16.mxu0 0
      %1659 = vmatpush1.bf16.msra.mxu0 0
      %1660 = vmatprep.subr.bf16.mxu0 0
      %1661 = vmatpush1.bf16.msra.mxu0 0
      %1662 = vmatprep.subr.bf16.mxu0 0
      %1663 = vmatpush1.bf16.msra.mxu0 0
      %1664 = vmatprep.subr.bf16.mxu0 0
      %1665 = vmatpush1.bf16.msra.mxu0 0
      %1666 = vmatprep.subr.bf16.mxu0 0
      %1667 = vmatpush1.bf16.msra.mxu0 0
      %1668 = vmatprep.subr.bf16.mxu0 0
      %1669 = vmatpush1.bf16.msra.mxu0 0
      %1670 = vmatprep.subr.bf16.mxu0 0
      %1671 = vmatpush1.bf16.msra.mxu0 0
      %1672 = vmatprep.subr.bf16.mxu0 0
      %1673 = vmatpush1.bf16.msra.mxu0 0
      %1674 = vmatprep.subr.bf16.mxu0 0
      %1675 = vmatpush1.bf16.msra.mxu0 0
      %1676 = vmatprep.subr.bf16.mxu0 0
      %1677 = vmatpush1.bf16.msra.mxu0 0
      %1678 = vmatprep.subr.bf16.mxu0 0
      %1679 = vmatpush1.bf16.msra.mxu0 0
      %1680 = vmatprep.subr.bf16.mxu0 0
      %1681 = vmatpush1.bf16.msra.mxu0 0
      %1682 = vmatprep.subr.bf16.mxu0 0
      %1683 = vmatpush1.bf16.msra.mxu0 0
      %1684 = vmatprep.subr.bf16.mxu0 0
      %1685 = vmatpush1.bf16.msra.mxu0 0
      %1686 = vmatprep.mubr.bf16.mxu0 0
      %1687 = vmatmul.mubr.bf16.gmra.mrb[0].mxu0 %v1649
      %v1688 = vpop.f32.mrb[0].mxu0
      %v1689 = vadd.f32 0.0, %v1688
      %v1690 = vpop.f32.mrb[0].mxu0
      %v1691 = vpop.f32.mrb[0].mxu0
      %v1692 = vadd.f32 0.0, %v1691
      %v1693 = vpop.f32.mrb[0].mxu0
      %1694 = vdwg.mxu0
      %v1695 = vadd.f32 %v1417, %v1689
      %v1696 = vadd.f32 %v1420, %v1692
      %1697 = vrot.lane.b32.xlu0 %v865, 104
      %v1698 = vpop.permute.xlu0 %1697
      %1699 = vrot.lane.b32.xlu0 %v865, 72
      %v1700 = vpop.permute.xlu0 %1699
      %v1702 = vsel %vm870, %v1698, 0
      %v1705 = vsel %vm870, %v1700, 0
      %1707 = vmatprep.subr.bf16.mxu0 0
      %1708 = vmatpush1.bf16.xpose.msra.mxu0 %v1705
      %1709 = vmatprep.subr.bf16.mxu0 0
      %1710 = vmatpush1.bf16.xpose.msra.mxu0 0
      %1711 = vmatprep.subr.bf16.mxu0 0
      %1712 = vmatpush1.bf16.xpose.msra.mxu0 0
      %1713 = vmatprep.subr.bf16.mxu0 0
      %1714 = vmatpush1.bf16.xpose.msra.mxu0 0
      %1715 = vmatprep.subr.bf16.mxu0 0
      %1716 = vmatpush1.bf16.xpose.msra.mxu0 0
      %1717 = vmatprep.subr.bf16.mxu0 0
      %1718 = vmatpush1.bf16.xpose.msra.mxu0 0
      %1719 = vmatprep.subr.bf16.mxu0 0
      %1720 = vmatpush1.bf16.xpose.msra.mxu0 0
      %1721 = vmatprep.subr.bf16.mxu0 0
      %1722 = vmatpush1.bf16.xpose.msra.mxu0 0
      %1723 = vmatprep.subr.bf16.mxu0 0
      %1724 = vmatpush1.bf16.xpose.msra.mxu0 0
      %1725 = vmatprep.subr.bf16.mxu0 0
      %1726 = vmatpush1.bf16.xpose.msra.mxu0 0
      %1727 = vmatprep.subr.bf16.mxu0 0
      %1728 = vmatpush1.bf16.xpose.msra.mxu0 0
      %1729 = vmatprep.subr.bf16.mxu0 0
      %1730 = vmatpush1.bf16.xpose.msra.mxu0 0
      %1731 = vmatprep.subr.bf16.mxu0 0
      %1732 = vmatpush1.bf16.xpose.msra.mxu0 0
      %1733 = vmatprep.subr.bf16.mxu0 0
      %1734 = vmatpush1.bf16.xpose.msra.mxu0 0
      %1735 = vmatprep.subr.bf16.mxu0 0
      %1736 = vmatpush1.bf16.xpose.msra.mxu0 0
      %1737 = vmatprep.subr.bf16.mxu0 0
      %1738 = vmatpush1.bf16.xpose.msra.mxu0 0
      %1739 = vmatprep.mubr.bf16.mxu0 0
      %1740 = vmatmul.mubr.bf16.gmra.mrb[0].mxu0 %v1702
      %v1741 = vpop.f32.mrb[0].mxu0
      %v1742 = vadd.f32 0.0, %v1741
      %v1743 = vpop.f32.mrb[0].mxu0
      %v1744 = vpop.f32.mrb[0].mxu0
      %v1745 = vpop.f32.mrb[0].mxu0
      %1746 = vdwg.mxu0
      %1747 = vrot.lane.b32.xlu0 %v866, 104
      %v1748 = vpop.permute.xlu0 %1747
      %1749 = vrot.lane.b32.xlu0 %v866, 72
      %v1750 = vpop.permute.xlu0 %1749
      %v1752 = vsel %vm870, %v1748, 0
      %v1755 = vsel %vm870, %v1750, 0
      %1757 = vmatprep.subr.bf16.mxu0 0
      %1758 = vmatpush1.bf16.xpose.msra.mxu0 %v1755
      %1759 = vmatprep.subr.bf16.mxu0 0
      %1760 = vmatpush1.bf16.xpose.msra.mxu0 0
      %1761 = vmatprep.subr.bf16.mxu0 0
      %1762 = vmatpush1.bf16.xpose.msra.mxu0 0
      %1763 = vmatprep.subr.bf16.mxu0 0
      %1764 = vmatpush1.bf16.xpose.msra.mxu0 0
      %1765 = vmatprep.subr.bf16.mxu0 0
      %1766 = vmatpush1.bf16.xpose.msra.mxu0 0
      %1767 = vmatprep.subr.bf16.mxu0 0
      %1768 = vmatpush1.bf16.xpose.msra.mxu0 0
      %1769 = vmatprep.subr.bf16.mxu0 0
      %1770 = vmatpush1.bf16.xpose.msra.mxu0 0
      %1771 = vmatprep.subr.bf16.mxu0 0
      %1772 = vmatpush1.bf16.xpose.msra.mxu0 0
      %1773 = vmatprep.subr.bf16.mxu0 0
      %1774 = vmatpush1.bf16.xpose.msra.mxu0 0
      %1775 = vmatprep.subr.bf16.mxu0 0
      %1776 = vmatpush1.bf16.xpose.msra.mxu0 0
      %1777 = vmatprep.subr.bf16.mxu0 0
      %1778 = vmatpush1.bf16.xpose.msra.mxu0 0
      %1779 = vmatprep.subr.bf16.mxu0 0
      %1780 = vmatpush1.bf16.xpose.msra.mxu0 0
      %1781 = vmatprep.subr.bf16.mxu0 0
      %1782 = vmatpush1.bf16.xpose.msra.mxu0 0
      %1783 = vmatprep.subr.bf16.mxu0 0
      %1784 = vmatpush1.bf16.xpose.msra.mxu0 0
      %1785 = vmatprep.subr.bf16.mxu0 0
      %1786 = vmatpush1.bf16.xpose.msra.mxu0 0
      %1787 = vmatprep.subr.bf16.mxu0 0
      %1788 = vmatpush1.bf16.xpose.msra.mxu0 0
      %1789 = vmatprep.mubr.bf16.mxu0 0
      %1790 = vmatmul.mubr.bf16.gmra.mrb[0].mxu0 %v1752
      %v1791 = vpop.f32.mrb[0].mxu0
      %v1792 = vadd.f32 0.0, %v1791
      %v1793 = vpop.f32.mrb[0].mxu0
      %v1794 = vpop.f32.mrb[0].mxu0
      %v1795 = vpop.f32.mrb[0].mxu0
      %1796 = vdwg.mxu0
      %v1797 = vmul.f32 %v1742, 0.35355338
      %v1798 = vmul.f32 %v1792, 0.35355338
      %v1799 = vadd.f32 %v1797, %v973
      %v1800 = vadd.f32 %v1798, %v977
      %v1801 = vsel %vm870, %v1799, -inf
      %1802 = vmax.xlane.f32.xlu0 %v1801
      %v1803 = vpop.xlane.xlu0 %1802
      %v1804 = vsel %vm870, %v1800, -inf
      %1805 = vmax.xlane.f32.xlu0 %v1804
      %v1806 = vpop.xlane.xlu0 %1805
      %v1807 = vsub.f32 %v1799, %v1803
      %v1808 = vsub.f32 %v1800, %v1806
      %v1809 = vmul.f32 %v1807, 1.442695
      %v1810 = vpow.pop %v1809
      %v1811 = vmul.f32 %v1808, 1.442695
      %v1812 = vpow.pop %v1811
      %v1813 = vsel %vm870, %v1810, 0.0
      %1814 = vadd.xlane.f32.xlu0 %v1813
      %v1815 = vpop.xlane.xlu0 %1814
      %v1816 = vsel %vm870, %v1812, 0.0
      %1817 = vadd.xlane.f32.xlu0 %v1816
      %v1818 = vpop.xlane.xlu0 %1817
      %v1819 = vrcp.pop %v1815
      %v1820 = vrcp.pop %v1818
      %v1821 = vmul.f32 %v1810, %v1819
      %v1822 = vmul.f32 %v1812, %v1820
      %v1823 = vpack.c.bf16 %v1821, %v1821
      %v1824 = vpack.c.bf16 %v1822, %v1822
      %1825 = vrot.lane.b32.xlu0 %v865, 40
      %v1826 = vpop.permute.xlu0 %1825
      %v1828 = vsel %vm870, %v1823, 0
      %v1831 = vsel %vm1011, %v1826, 0
      %1833 = vmatprep.subr.bf16.mxu0 0
      %1834 = vmatpush1.bf16.msra.mxu0 %v1831
      %1835 = vmatprep.subr.bf16.mxu0 0
      %1836 = vmatpush1.bf16.msra.mxu0 0
      %1837 = vmatprep.subr.bf16.mxu0 0
      %1838 = vmatpush1.bf16.msra.mxu0 0
      %1839 = vmatprep.subr.bf16.mxu0 0
      %1840 = vmatpush1.bf16.msra.mxu0 0
      %1841 = vmatprep.subr.bf16.mxu0 0
      %1842 = vmatpush1.bf16.msra.mxu0 0
      %1843 = vmatprep.subr.bf16.mxu0 0
      %1844 = vmatpush1.bf16.msra.mxu0 0
      %1845 = vmatprep.subr.bf16.mxu0 0
      %1846 = vmatpush1.bf16.msra.mxu0 0
      %1847 = vmatprep.subr.bf16.mxu0 0
      %1848 = vmatpush1.bf16.msra.mxu0 0
      %1849 = vmatprep.subr.bf16.mxu0 0
      %1850 = vmatpush1.bf16.msra.mxu0 0
      %1851 = vmatprep.subr.bf16.mxu0 0
      %1852 = vmatpush1.bf16.msra.mxu0 0
      %1853 = vmatprep.subr.bf16.mxu0 0
      %1854 = vmatpush1.bf16.msra.mxu0 0
      %1855 = vmatprep.subr.bf16.mxu0 0
      %1856 = vmatpush1.bf16.msra.mxu0 0
      %1857 = vmatprep.subr.bf16.mxu0 0
      %1858 = vmatpush1.bf16.msra.mxu0 0
      %1859 = vmatprep.subr.bf16.mxu0 0
      %1860 = vmatpush1.bf16.msra.mxu0 0
      %1861 = vmatprep.subr.bf16.mxu0 0
      %1862 = vmatpush1.bf16.msra.mxu0 0
      %1863 = vmatprep.subr.bf16.mxu0 0
      %1864 = vmatpush1.bf16.msra.mxu0 0
      %1865 = vmatprep.mubr.bf16.mxu0 0
      %1866 = vmatmul.mubr.bf16.gmra.mrb[0].mxu0 %v1828
      %v1867 = vpop.f32.mrb[0].mxu0
      %v1868 = vadd.f32 0.0, %v1867
      %v1869 = vpop.f32.mrb[0].mxu0
      %v1870 = vpop.f32.mrb[0].mxu0
      %v1871 = vpop.f32.mrb[0].mxu0
      %1872 = vdwg.mxu0
      %1873 = vrot.lane.b32.xlu0 %v866, 40
      %v1874 = vpop.permute.xlu0 %1873
      %v1876 = vsel %vm870, %v1824, 0
      %v1879 = vsel %vm1011, %v1874, 0
      %1881 = vmatprep.subr.bf16.mxu0 0
      %1882 = vmatpush1.bf16.msra.mxu0 %v1879
      %1883 = vmatprep.subr.bf16.mxu0 0
      %1884 = vmatpush1.bf16.msra.mxu0 0
      %1885 = vmatprep.subr.bf16.mxu0 0
      %1886 = vmatpush1.bf16.msra.mxu0 0
      %1887 = vmatprep.subr.bf16.mxu0 0
      %1888 = vmatpush1.bf16.msra.mxu0 0
      %1889 = vmatprep.subr.bf16.mxu0 0
      %1890 = vmatpush1.bf16.msra.mxu0 0
      %1891 = vmatprep.subr.bf16.mxu0 0
      %1892 = vmatpush1.bf16.msra.mxu0 0
      %1893 = vmatprep.subr.bf16.mxu0 0
      %1894 = vmatpush1.bf16.msra.mxu0 0
      %1895 = vmatprep.subr.bf16.mxu0 0
      %1896 = vmatpush1.bf16.msra.mxu0 0
      %1897 = vmatprep.subr.bf16.mxu0 0
      %1898 = vmatpush1.bf16.msra.mxu0 0
      %1899 = vmatprep.subr.bf16.mxu0 0
      %1900 = vmatpush1.bf16.msra.mxu0 0
      %1901 = vmatprep.subr.bf16.mxu0 0
      %1902 = vmatpush1.bf16.msra.mxu0 0
      %1903 = vmatprep.subr.bf16.mxu0 0
      %1904 = vmatpush1.bf16.msra.mxu0 0
      %1905 = vmatprep.subr.bf16.mxu0 0
      %1906 = vmatpush1.bf16.msra.mxu0 0
      %1907 = vmatprep.subr.bf16.mxu0 0
      %1908 = vmatpush1.bf16.msra.mxu0 0
      %1909 = vmatprep.subr.bf16.mxu0 0
      %1910 = vmatpush1.bf16.msra.mxu0 0
      %1911 = vmatprep.subr.bf16.mxu0 0
      %1912 = vmatpush1.bf16.msra.mxu0 0
      %1913 = vmatprep.mubr.bf16.mxu0 0
      %1914 = vmatmul.mubr.bf16.gmra.mrb[0].mxu0 %v1876
      %v1915 = vpop.f32.mrb[0].mxu0
      %v1916 = vadd.f32 0.0, %v1915
      %v1917 = vpop.f32.mrb[0].mxu0
      %v1918 = vpop.f32.mrb[0].mxu0
      %v1919 = vpop.f32.mrb[0].mxu0
      %1920 = vdwg.mxu0
      %v1921 = vpack.c.bf16 %v1916, %v1868
      %v1923 = vsel %vm870, %v1921, 0
      %v1926 = vsel %vm1011, %v864, 0
      %1928 = vmatprep.subr.bf16.mxu0 0
      %1929 = vmatpush1.bf16.msra.mxu0 %v1926
      %1930 = vmatprep.subr.bf16.mxu0 0
      %1931 = vmatpush1.bf16.msra.mxu0 0
      %1932 = vmatprep.subr.bf16.mxu0 0
      %1933 = vmatpush1.bf16.msra.mxu0 0
      %1934 = vmatprep.subr.bf16.mxu0 0
      %1935 = vmatpush1.bf16.msra.mxu0 0
      %1936 = vmatprep.subr.bf16.mxu0 0
      %1937 = vmatpush1.bf16.msra.mxu0 0
      %1938 = vmatprep.subr.bf16.mxu0 0
      %1939 = vmatpush1.bf16.msra.mxu0 0
      %1940 = vmatprep.subr.bf16.mxu0 0
      %1941 = vmatpush1.bf16.msra.mxu0 0
      %1942 = vmatprep.subr.bf16.mxu0 0
      %1943 = vmatpush1.bf16.msra.mxu0 0
      %1944 = vmatprep.subr.bf16.mxu0 0
      %1945 = vmatpush1.bf16.msra.mxu0 0
      %1946 = vmatprep.subr.bf16.mxu0 0
      %1947 = vmatpush1.bf16.msra.mxu0 0
      %1948 = vmatprep.subr.bf16.mxu0 0
      %1949 = vmatpush1.bf16.msra.mxu0 0
      %1950 = vmatprep.subr.bf16.mxu0 0
      %1951 = vmatpush1.bf16.msra.mxu0 0
      %1952 = vmatprep.subr.bf16.mxu0 0
      %1953 = vmatpush1.bf16.msra.mxu0 0
      %1954 = vmatprep.subr.bf16.mxu0 0
      %1955 = vmatpush1.bf16.msra.mxu0 0
      %1956 = vmatprep.subr.bf16.mxu0 0
      %1957 = vmatpush1.bf16.msra.mxu0 0
      %1958 = vmatprep.subr.bf16.mxu0 0
      %1959 = vmatpush1.bf16.msra.mxu0 0
      %1960 = vmatprep.mubr.bf16.mxu0 0
      %1961 = vmatmul.mubr.bf16.gmra.mrb[0].mxu0 %v1923
      %v1962 = vpop.f32.mrb[0].mxu0
      %v1963 = vadd.f32 0.0, %v1962
      %v1964 = vpop.f32.mrb[0].mxu0
      %v1965 = vpop.f32.mrb[0].mxu0
      %v1966 = vadd.f32 0.0, %v1965
      %v1967 = vpop.f32.mrb[0].mxu0
      %1968 = vdwg.mxu0
      %v1969 = vadd.f32 %v1695, %v1963
      %v1970 = vadd.f32 %v1696, %v1966
      %v1971 = vld [vmem:[%s704] sm:$0x1]
      %v1973 = vlaneseq
      %v1974 = vshrl.u32 %v1973, 7
      %v1975 = vsub.s32 0, %v1974
      %v1976 = vrot.slane %v1971, %v1975
      %v1978 = vadd.f32 %v1969, %v1976
      %v1979 = vadd.f32 %v1970, %v1976
      %v1980 = vadd.f32 %v1978, %v788
      %v1981 = vadd.f32 %v1979, %v789
      %v1982 = vld [vmem:[%s707] sm:$0x1]
      %v1983 = vld [vmem:[%s710] sm:$0x1]
      %v1984 = vsel %vm816, %v1980, 0.0
      %1985 = vadd.xlane.f32.xlu0 %v1984
      %v1986 = vpop.xlane.xlu0 %1985
      %v1987 = vsel %vm816, %v1981, 0.0
      %1988 = vadd.xlane.f32.xlu0 %v1987
      %v1989 = vpop.xlane.xlu0 %1988
      %v1990 = vrcp.pop 32.0
      %v1991 = vmul.f32 %v1986, %v1990
      %v1992 = vmul.f32 %v1989, %v1990
      %v1993 = vsub.f32 %v1980, %v1991
      %v1994 = vsub.f32 %v1981, %v1992
      %v1995 = vmul.f32 %v1993, %v1993
      %v1996 = vmul.f32 %v1994, %v1994
      %v1997 = vsel %vm816, %v1995, 0.0
      %1998 = vadd.xlane.f32.xlu0 %v1997
      %v1999 = vpop.xlane.xlu0 %1998
      %v2000 = vsel %vm816, %v1996, 0.0
      %2001 = vadd.xlane.f32.xlu0 %v2000
      %v2002 = vpop.xlane.xlu0 %2001
      %v2003 = vmul.f32 %v1999, %v1990
      %v2004 = vmul.f32 %v2002, %v1990
      %v2005 = vadd.f32 %v2003, 1e-12
      %v2006 = vadd.f32 %v2004, 1e-12
      %v2007 = vrsqrt.pop %v2005
      %v2008 = vrsqrt.pop %v2006
      %v2009 = vmul.f32 %v1993, %v2007
      %v2010 = vmul.f32 %v1994, %v2008
      %v2012 = vlaneseq
      %v2013 = vshrl.u32 %v2012, 7
      %v2014 = vsub.s32 0, %v2013
      %v2015 = vrot.slane %v1982, %v2014
      %v2017 = vmul.f32 %v2009, %v2015
      %v2018 = vmul.f32 %v2010, %v2015
      %v2020 = vlaneseq
      %v2021 = vshrl.u32 %v2020, 7
      %v2022 = vsub.s32 0, %v2021
      %v2023 = vrot.slane %v1983, %v2022
      %v2025 = vadd.f32 %v2017, %v2023
      %v2026 = vadd.f32 %v2018, %v2023
      %v2027 = vpack.c.bf16 %v2026, %v2025
      %v2028 = vld [vmem:[%s715] sm:$0xf]
      %v2029 = vld [vmem:[%s715 + $0x4] sm:$0xf]
      %v2030 = vld [vmem:[%s715 + $0x8] sm:$0xf]
      %v2031 = vld [vmem:[%s715 + $0xc] sm:$0xf]
      %v2032 = vld [vmem:[%s718] sm:$0x1]
      %v2034 = vlaneseq
      %v2035 = vshrl.u32 %v2034, 7
      %v2036 = vsub.s32 0, %v2035
      %v2037 = vrot.slane %v2032, %v2036
      %v2043 = vunpack.c.l.b16 %v2028
      %v2044 = vunpack.c.l.b16 %v2029
      %v2045 = vunpack.c.l.b16 %v2030
      %v2046 = vunpack.c.l.b16 %v2031
      %v2047 = vpack.c.b16 %v2044, %v2043
      %v2048 = vpack.c.b16 %v2046, %v2045
      %v2052 = vsel %vm816, %v2027, 0
      %2054 = vmatprep.subr.bf16.mxu0 0
      %2055 = vmatpush1.bf16.msra.mxu0 %v2047
      %2056 = vmatprep.subr.bf16.mxu0 0
      %2057 = vmatpush1.bf16.msra.mxu0 %v2048
      %2058 = vmatprep.subr.bf16.mxu0 0
      %2059 = vmatpush1.bf16.msra.mxu0 0
      %2060 = vmatprep.subr.bf16.mxu0 0
      %2061 = vmatpush1.bf16.msra.mxu0 0
      %2062 = vmatprep.subr.bf16.mxu0 0
      %2063 = vmatpush1.bf16.msra.mxu0 0
      %2064 = vmatprep.subr.bf16.mxu0 0
      %2065 = vmatpush1.bf16.msra.mxu0 0
      %2066 = vmatprep.subr.bf16.mxu0 0
      %2067 = vmatpush1.bf16.msra.mxu0 0
      %2068 = vmatprep.subr.bf16.mxu0 0
      %2069 = vmatpush1.bf16.msra.mxu0 0
      %2070 = vmatprep.subr.bf16.mxu0 0
      %2071 = vmatpush1.bf16.msra.mxu0 0
      %2072 = vmatprep.subr.bf16.mxu0 0
      %2073 = vmatpush1.bf16.msra.mxu0 0
      %2074 = vmatprep.subr.bf16.mxu0 0
      %2075 = vmatpush1.bf16.msra.mxu0 0
      %2076 = vmatprep.subr.bf16.mxu0 0
      %2077 = vmatpush1.bf16.msra.mxu0 0
      %2078 = vmatprep.subr.bf16.mxu0 0
      %2079 = vmatpush1.bf16.msra.mxu0 0
      %2080 = vmatprep.subr.bf16.mxu0 0
      %2081 = vmatpush1.bf16.msra.mxu0 0
      %2082 = vmatprep.subr.bf16.mxu0 0
      %2083 = vmatpush1.bf16.msra.mxu0 0
      %2084 = vmatprep.subr.bf16.mxu0 0
      %2085 = vmatpush1.bf16.msra.mxu0 0
      %2086 = vmatprep.mubr.bf16.mxu0 0
      %2087 = vmatmul.mubr.bf16.gmra.mrb[0].mxu0 %v2052
      %v2088 = vpop.f32.mrb[0].mxu0
      %v2089 = vadd.f32 %v2037, %v2088
      %v2090 = vpop.f32.mrb[0].mxu0
      %v2091 = vpop.f32.mrb[0].mxu0
      %v2092 = vadd.f32 %v2037, %v2091
      %v2093 = vpop.f32.mrb[0].mxu0
      %2094 = vdwg.mxu0
      %v2095 = vmul.f32 %v2089, 0.5
      %v2096 = vmul.f32 %v2092, 0.5
      %v2097 = vmul.f32 %v2089, 0.044715
      %v2098 = vmul.f32 %v2092, 0.044715
      %v2099 = vmul.f32 %v2097, %v2089
      %v2100 = vmul.f32 %v2098, %v2092
      %v2101 = vmul.f32 %v2099, %v2089
      %v2102 = vmul.f32 %v2100, %v2092
      %v2103 = vadd.f32 %v2089, %v2101
      %v2104 = vadd.f32 %v2092, %v2102
      %v2105 = vmul.f32 %v2103, 0.7978846
      %v2106 = vmul.f32 %v2104, 0.7978846
      %v2107 = vtanh.pop %v2105
      %v2108 = vtanh.pop %v2106
      %v2109 = vadd.f32 %v2107, 1.0
      %v2110 = vadd.f32 %v2108, 1.0
      %v2111 = vmul.f32 %v2095, %v2109
      %v2112 = vmul.f32 %v2096, %v2110
      %v2113 = vpack.c.bf16 %v2112, %v2111
      %v2114 = vld [vmem:[%s723] sm:$0xf]
      %v2115 = vld [vmem:[%s723 + $0x4] sm:$0xf]
      %v2116 = vld [vmem:[%s723 + $0x8] sm:$0xf]
      %v2117 = vld [vmem:[%s723 + $0xc] sm:$0xf]
      %v2118 = vld [vmem:[%s723 + $0x10] sm:$0xf]
      %v2119 = vld [vmem:[%s723 + $0x14] sm:$0xf]
      %v2120 = vld [vmem:[%s723 + $0x18] sm:$0xf]
      %v2121 = vld [vmem:[%s723 + $0x1c] sm:$0xf]
      %v2122 = vld [vmem:[%s726] sm:$0x1]
      %v2124 = vlaneseq
      %v2125 = vshrl.u32 %v2124, 7
      %v2126 = vsub.s32 0, %v2125
      %v2127 = vrot.slane %v2122, %v2126
      %v2137 = vunpack.c.l.b16 %v2114
      %v2138 = vunpack.c.l.b16 %v2115
      %v2139 = vunpack.c.l.b16 %v2116
      %v2140 = vunpack.c.l.b16 %v2117
      %v2141 = vunpack.c.l.b16 %v2118
      %v2142 = vunpack.c.l.b16 %v2119
      %v2143 = vunpack.c.l.b16 %v2120
      %v2144 = vunpack.c.l.b16 %v2121
      %v2145 = vpack.c.b16 %v2138, %v2137
      %v2146 = vpack.c.b16 %v2140, %v2139
      %v2147 = vpack.c.b16 %v2142, %v2141
      %v2148 = vpack.c.b16 %v2144, %v2143
      %vm2153 = vcmask 523264
      %v2155 = vsel %vm2153, %v2113, 0
      %2157 = vmatprep.subr.bf16.mxu0 0
      %2158 = vmatpush1.bf16.msra.mxu0 %v2145
      %2159 = vmatprep.subr.bf16.mxu0 0
      %2160 = vmatpush1.bf16.msra.mxu0 %v2146
      %2161 = vmatprep.subr.bf16.mxu0 0
      %2162 = vmatpush1.bf16.msra.mxu0 %v2147
      %2163 = vmatprep.subr.bf16.mxu0 0
      %2164 = vmatpush1.bf16.msra.mxu0 %v2148
      %2165 = vmatprep.subr.bf16.mxu0 0
      %2166 = vmatpush1.bf16.msra.mxu0 0
      %2167 = vmatprep.subr.bf16.mxu0 0
      %2168 = vmatpush1.bf16.msra.mxu0 0
      %2169 = vmatprep.subr.bf16.mxu0 0
      %2170 = vmatpush1.bf16.msra.mxu0 0
      %2171 = vmatprep.subr.bf16.mxu0 0
      %2172 = vmatpush1.bf16.msra.mxu0 0
      %2173 = vmatprep.subr.bf16.mxu0 0
      %2174 = vmatpush1.bf16.msra.mxu0 0
      %2175 = vmatprep.subr.bf16.mxu0 0
      %2176 = vmatpush1.bf16.msra.mxu0 0
      %2177 = vmatprep.subr.bf16.mxu0 0
      %2178 = vmatpush1.bf16.msra.mxu0 0
      %2179 = vmatprep.subr.bf16.mxu0 0
      %2180 = vmatpush1.bf16.msra.mxu0 0
      %2181 = vmatprep.subr.bf16.mxu0 0
      %2182 = vmatpush1.bf16.msra.mxu0 0
      %2183 = vmatprep.subr.bf16.mxu0 0
      %2184 = vmatpush1.bf16.msra.mxu0 0
      %2185 = vmatprep.subr.bf16.mxu0 0
      %2186 = vmatpush1.bf16.msra.mxu0 0
      %2187 = vmatprep.subr.bf16.mxu0 0
      %2188 = vmatpush1.bf16.msra.mxu0 0
      %2189 = vmatprep.mubr.bf16.mxu0 0
      %2190 = vmatmul.mubr.bf16.gmra.mrb[0].mxu0 %v2155
      %v2191 = vpop.f32.mrb[0].mxu0
      %v2192 = vadd.f32 %v2127, %v2191
      %v2193 = vpop.f32.mrb[0].mxu0
      %v2194 = vpop.f32.mrb[0].mxu0
      %v2195 = vadd.f32 %v2127, %v2194
      %v2196 = vpop.f32.mrb[0].mxu0
      %2197 = vdwg.mxu0
      %v2198 = vadd.f32 %v2192, %v2025
      %v2199 = vadd.f32 %v2195, %v2026
      %v2200 = vld [vmem:[%s729] sm:$0x1]
      %v2201 = vld [vmem:[%s732] sm:$0x1]
      %v2202 = vsel %vm816, %v2198, 0.0
      %2203 = vadd.xlane.f32.xlu0 %v2202
      %v2204 = vpop.xlane.xlu0 %2203
      %v2205 = vsel %vm816, %v2199, 0.0
      %2206 = vadd.xlane.f32.xlu0 %v2205
      %v2207 = vpop.xlane.xlu0 %2206
      %v2208 = vmul.f32 %v2204, %v1990
      %v2209 = vmul.f32 %v2207, %v1990
      %v2210 = vsub.f32 %v2198, %v2208
      %v2211 = vsub.f32 %v2199, %v2209
      %v2212 = vmul.f32 %v2210, %v2210
      %v2213 = vmul.f32 %v2211, %v2211
      %v2214 = vsel %vm816, %v2212, 0.0
      %2215 = vadd.xlane.f32.xlu0 %v2214
      %v2216 = vpop.xlane.xlu0 %2215
      %v2217 = vsel %vm816, %v2213, 0.0
      %2218 = vadd.xlane.f32.xlu0 %v2217
      %v2219 = vpop.xlane.xlu0 %2218
      %v2220 = vmul.f32 %v2216, %v1990
      %v2221 = vmul.f32 %v2219, %v1990
      %v2222 = vadd.f32 %v2220, 1e-12
      %v2223 = vadd.f32 %v2221, 1e-12
      %v2224 = vrsqrt.pop %v2222
      %v2225 = vrsqrt.pop %v2223
      %v2226 = vmul.f32 %v2210, %v2224
      %v2227 = vmul.f32 %v2211, %v2225
      %v2229 = vlaneseq
      %v2230 = vshrl.u32 %v2229, 7
      %v2231 = vsub.s32 0, %v2230
      %v2232 = vrot.slane %v2200, %v2231
      %v2234 = vmul.f32 %v2226, %v2232
      %v2235 = vmul.f32 %v2227, %v2232
      %v2237 = vlaneseq
      %v2238 = vshrl.u32 %v2237, 7
      %v2239 = vsub.s32 0, %v2238
      %v2240 = vrot.slane %v2201, %v2239
      %v2242 = vadd.f32 %v2234, %v2240
      %v2243 = vadd.f32 %v2235, %v2240
      %2244 = vst.msk [vmem:[#allocation2] sm:$0xff] %vm816, %v2242
      %2245 = vst.msk [vmem:[#allocation2 + $0x8] sm:$0xff] %vm816, %v2243
      %p2246 = scmp.eq.s32.totalorder %s29, 1
      // Predicated region
      $region97: #{_lambda_.1} parent=91 // pred_check
        %p2247 = pneg %p2246
      $region98: #{_lambda_.1} parent=91 // pred_check_branch
        %2249 = sbr.rel (%p2247) target = $region100
      $region99: #{_lambda_.1} parent=91 // pred_region
        %v2250 = vpack.c.bf16 %v2243, %v2242
        %v2251 = vld [vmem:[%s16] sm:$0xf]
        %v2252 = vld [vmem:[%s16 + $0x4] sm:$0xf]
        %v2253 = vld [vmem:[%s16 + $0x8] sm:$0xf]
        %v2254 = vld [vmem:[%s16 + $0xc] sm:$0xf]
        %v2255 = vld [vmem:[%s17] sm:$0x1]
        %v2257 = vlaneseq
        %v2258 = vshrl.u32 %v2257, 7
        %v2259 = vsub.s32 0, %v2258
        %v2260 = vrot.slane %v2255, %v2259
        %v2266 = vunpack.c.l.b16 %v2251
        %v2267 = vunpack.c.l.b16 %v2252
        %v2268 = vunpack.c.l.b16 %v2253
        %v2269 = vunpack.c.l.b16 %v2254
        %v2270 = vpack.c.b16 %v2267, %v2266
        %v2271 = vpack.c.b16 %v2269, %v2268
        %v2275 = vsel %vm816, %v2250, 0
        %2277 = vmatprep.subr.bf16.mxu0 0
        %2278 = vmatpush1.bf16.msra.mxu0 %v2270
        %2279 = vmatprep.subr.bf16.mxu0 0
        %2280 = vmatpush1.bf16.msra.mxu0 %v2271
        %2281 = vmatprep.subr.bf16.mxu0 0
        %2282 = vmatpush1.bf16.msra.mxu0 0
        %2283 = vmatprep.subr.bf16.mxu0 0
        %2284 = vmatpush1.bf16.msra.mxu0 0
        %2285 = vmatprep.subr.bf16.mxu0 0
        %2286 = vmatpush1.bf16.msra.mxu0 0
        %2287 = vmatprep.subr.bf16.mxu0 0
        %2288 = vmatpush1.bf16.msra.mxu0 0
        %2289 = vmatprep.subr.bf16.mxu0 0
        %2290 = vmatpush1.bf16.msra.mxu0 0
        %2291 = vmatprep.subr.bf16.mxu0 0
        %2292 = vmatpush1.bf16.msra.mxu0 0
        %2293 = vmatprep.subr.bf16.mxu0 0
        %2294 = vmatpush1.bf16.msra.mxu0 0
        %2295 = vmatprep.subr.bf16.mxu0 0
        %2296 = vmatpush1.bf16.msra.mxu0 0
        %2297 = vmatprep.subr.bf16.mxu0 0
        %2298 = vmatpush1.bf16.msra.mxu0 0
        %2299 = vmatprep.subr.bf16.mxu0 0
        %2300 = vmatpush1.bf16.msra.mxu0 0
        %2301 = vmatprep.subr.bf16.mxu0 0
        %2302 = vmatpush1.bf16.msra.mxu0 0
        %2303 = vmatprep.subr.bf16.mxu0 0
        %2304 = vmatpush1.bf16.msra.mxu0 0
        %2305 = vmatprep.subr.bf16.mxu0 0
        %2306 = vmatpush1.bf16.msra.mxu0 0
        %2307 = vmatprep.subr.bf16.mxu0 0
        %2308 = vmatpush1.bf16.msra.mxu0 0
        %2309 = vmatprep.mubr.bf16.mxu0 0
        %2310 = vmatmul.mubr.bf16.gmra.mrb[0].mxu0 %v2275
        %v2311 = vpop.f32.mrb[0].mxu0
        %v2312 = vadd.f32 %v2260, %v2311
        %v2313 = vpop.f32.mrb[0].mxu0
        %v2314 = vpop.f32.mrb[0].mxu0
        %v2315 = vadd.f32 %v2260, %v2314
        %v2316 = vpop.f32.mrb[0].mxu0
        %2317 = vdwg.mxu0
        %2318 = vst [vmem:[%s18] sm:$0xff] %v2312
        %2319 = vst [vmem:[%s18 + $0x8] sm:$0xff] %v2315
      $region100: #{_lambda_.1} parent=91 // pred_fallthru
        _
      // Predicated region
      $region101: #{_lambda_.1} parent=91 // pred_check
        %p2320 = pneg %p480
      $region102: #{_lambda_.1} parent=91 // pred_check_branch
        %2322 = sbr.rel (%p2320) target = $region104
      $region103: #{_lambda_.1} parent=91 // pred_region
        _
      $region104: #{_lambda_.1} parent=91 // pred_fallthru
        _
      // Predicated region
      $region105: #{_lambda_.1} parent=91 // pred_check
        %p2323 = pneg %p480
      $region106: #{_lambda_.1} parent=91 // pred_check_branch
        %2325 = sbr.rel (%p2323) target = $region108
      $region107: #{_lambda_.1} parent=91 // pred_region
        _
      $region108: #{_lambda_.1} parent=91 // pred_fallthru
        _
    $region92: #{_lambda_.1} parent=5 // pred_fallthru
      _
    %p2326 = scmp.le.s32.totalorder 2, %s24
    // Predicated region
    $region109: #{_lambda_.1} parent=5 // pred_check
      %p2327 = pneg %p2326
    $region110: #{_lambda_.1} parent=5 // pred_check_branch
      %2329 = sbr.rel (%p2327) target = $region112
    $region111: #{_lambda_.1} parent=5 // pred_region
      %s2330 = ssub.s32 %s24, 2
    $region112: #{_lambda_.1} parent=5 // pred_fallthru
      _
  $region6: #{_lambda_.1} parent=0 // loop_footer
    %s28 = sadd.s32 1, %s24
  $region7: #{_lambda_.1} parent=0 // loop_footer_branch
    %23 = sbr.rel target = $region3
  $region8: #{_lambda_.1} parent=0 // loop_exit
    _

</llo_original>
